<compile_context>
chip_gen: v6e
topology: v6e:2x2x1
jax: 0.10.0
libtpu: 0.0.40
codegen_flags: <defaults>
</compile_context>

<pallas_src>
import functools

import jax
import jax.numpy as jnp
from jax.experimental import pallas as pl
from jax.experimental.pallas import tpu as pltpu


def _conv5x5_kernel(x_ref, w_ref, b_ref, o_ref, *, ht, w, cin, cout_major):
    """One (batch, row-tile) grid step.

    x_ref: (ht+4, w+4, cin) bf16 -- reflection-padded tile, 2-row/col halo included.
    w_ref: (25*cin, cout)   bf16 -- (kh, kw, cin)-major flattened conv weights.
    b_ref: (1, cout)        f32
    o_ref: (cout, ht*w) f32 if cout_major else (ht*w, cout) f32
    """
    xt = x_ref[...]                                           # (ht+4, w+4, cin)

    # im2col: fold all 25 taps into the contraction dim. K order = (kh, kw, cin)
    # to match the wrapper-side weight reshape.
    patches = jnp.concatenate(
        [xt[di:di + ht, dj:dj + w, :] for di in range(5) for dj in range(5)],
        axis=-1)                                              # (ht, w, 25*cin)
    lhs = patches.reshape(ht * w, 25 * cin)                   # (M, K)

    # Single bf16 x bf16 -> f32 MXU matmul (default precision, f32 accumulate).
    y = jnp.dot(lhs, w_ref[...], preferred_element_type=jnp.float32)
    y = y + b_ref[...]                                        # (M, cout)

    if cout_major:
        # Lane-dense store: ht*w (multiple of 128) sits on the lane axis instead
        # of a masked store with only `cout` useful lanes.
        o_ref[...] = jnp.transpose(y).astype(o_ref.dtype)     # (cout, ht*w)
    else:
        o_ref[...] = y.astype(o_ref.dtype)                    # (ht*w, cout)


def _round_up(n, m):
    return ((n + m - 1) // m) * m


def _pick_row_tile(h, w, cin):
    """Largest divisor of h keeping the per-tile im2col block modest."""
    max_rows = min(4096, max(128, (2 << 20) // max(1, 25 * cin * 2)))
    best = 1
    for ht in range(1, h + 1):
        if h % ht == 0 and ht * w <= max_rows:
            best = ht
    return best


def conv5x5_pallas(x, weight, bias, *, row_tile=None):
    """ReflectionPad2d(2) + Conv2d(Cin, Cout, 5) forward.

    x:      (N, Cin, H, W) float
    weight: (Cout, Cin, 5, 5) float
    bias:   (Cout,) float
    returns (N, Cout, H, W) float32 (bf16 MXU operands, f32 accumulation)
    """
    n, cin, h, w = x.shape
    cout = weight.shape[0]
    assert weight.shape == (cout, cin, 5, 5)
    assert bias.shape == (cout,)
    assert h >= 3 and w >= 3, "reflection pad of 2 needs H, W >= 3"

    ht = row_tile if row_tile is not None else _pick_row_tile(h, w, cin)
    assert h % ht == 0, "row_tile must divide H"
    n_ht = h // ht
    cout_major = cout < 128          # lane-dense output store for small Cout

    # ---- One fused XLA prep pass: NCHW->NHWC, reflect-pad(2), bf16 cast and
    # row-tiling with a 4-row halo (kernel never special-cases image borders).
    # TODO(synk): accept NHWC / bf16 activations directly to drop this layout
    # pass entirely when chaining channels-last ops (largest relative win on v5e).
    x_nhwc = jnp.transpose(x, (0, 2, 3, 1))                      # (N, H, W, Cin)
    xp = jnp.pad(x_nhwc, ((0, 0), (2, 2), (2, 2), (0, 0)), mode="reflect")
    xp = xp.astype(jnp.bfloat16)                                 # (N, H+4, W+4, Cin)
    rows = jnp.arange(n_ht)[:, None] * ht + jnp.arange(ht + 4)[None, :]
    x_tiles = xp[:, rows]                                        # (N, nH, ht+4, W+4, Cin)

    # (Cout, Cin, 5, 5) -> (kh, kw, Cin, Cout) -> (25*Cin, Cout): tap-major K,
    # matching the kernel's im2col ordering.
    w_flat = jnp.transpose(weight, (2, 3, 1, 0)).reshape(25 * cin, cout)
    w_flat = w_flat.astype(jnp.bfloat16)
    b2d = bias.reshape(1, cout).astype(jnp.float32)

    if cout_major:
        out_shape = jax.ShapeDtypeStruct((n, n_ht, cout, ht * w), jnp.float32)
        out_block = (None, None, cout, ht * w)
    else:
        out_shape = jax.ShapeDtypeStruct((n, n_ht, ht * w, cout), jnp.float32)
        out_block = (None, None, ht * w, cout)

    # VMEM budget from the actual (lane/sublane-padded) block sizes; stay well
    # under v7x's 64 MiB physical VMEM.
    in_tile_b = (ht + 4) * _round_up(w + 4, 16) * _round_up(cin, 128) * 2
    w_b = _round_up(25 * cin, 16) * _round_up(cout, 128) * 2
    im2col_b = _round_up(ht * w, 16) * _round_up(25 * cin, 128) * 2
    if cout_major:
        out_tile_b = _round_up(cout, 8) * _round_up(ht * w, 128) * 4
    else:
        out_tile_b = _round_up(ht * w, 8) * _round_up(cout, 128) * 4
    est = 2 * (in_tile_b + out_tile_b) + w_b + 2 * im2col_b + (1 << 20)
    vmem_limit = int(min(max(2 * est, 32 << 20), 48 << 20))

    kernel = functools.partial(_conv5x5_kernel, ht=ht, w=w, cin=cin,
                               cout_major=cout_major)
    out = pl.pallas_call(
        kernel,
        out_shape=out_shape,
        grid=(n, n_ht),
        in_specs=[
            pl.BlockSpec((None, None, ht + 4, w + 4, cin),
                         lambda b, t: (b, t, 0, 0, 0)),
            pl.BlockSpec((25 * cin, cout), lambda b, t: (0, 0)),   # VMEM-resident
            pl.BlockSpec((1, cout), lambda b, t: (0, 0)),          # VMEM-resident
        ],
        out_specs=pl.BlockSpec(out_block, lambda b, t: (b, t, 0, 0)),
        compiler_params=pltpu.CompilerParams(
            dimension_semantics=("parallel", "parallel"),
            vmem_limit_bytes=vmem_limit,
        ),
    )(x_tiles, w_flat, b2d)

    # Layout plumbing back to NCHW.
    if cout_major:
        out = out.reshape(n, n_ht, cout, ht, w)
        out = jnp.transpose(out, (0, 2, 1, 3, 4)).reshape(n, cout, h, w)
    else:
        out = out.reshape(n, n_ht, ht, w, cout)
        out = jnp.transpose(out, (0, 4, 1, 2, 3)).reshape(n, cout, h, w)
    return out


def conv5x5_ref(x, weight, bias):
    """Pure-JAX f32 reference replicating the PyTorch forward exactly."""
    xp = jnp.pad(x, ((0, 0), (0, 0), (2, 2), (2, 2)), mode="reflect")
    n_, cin, h, w = x.shape
    cout = weight.shape[0]
    out = jnp.zeros((n_, cout, h, w), jnp.float32)
    for di in range(5):
        for dj in range(5):
            patch = xp[:, :, di:di + h, dj:dj + w]
            out = out + jnp.einsum("nchw,oc->nohw", patch, weight[:, :, di, dj],
                                   precision=jax.lax.Precision.HIGHEST)
    return out + bias[None, :, None, None]


if __name__ == "__main__":
    key = jax.random.PRNGKey(0)
    kx, kw, kb = jax.random.split(key, 3)
    n, cin, cout, h, w = 2, 4, 8, 16, 16

    x = jax.random.uniform(kx, (n, cin, h, w), dtype=jnp.float32)
    fan_in = cin * 5 * 5
    bound = 1.0 / (fan_in ** 0.5)
    weight = jax.random.uniform(kw, (cout, cin, 5, 5), jnp.float32, -bound, bound)
    bias = jax.random.uniform(kb, (cout,), jnp.float32, -bound, bound)

    # Reference computed on bf16-quantized operands (the kernel feeds the MXU
    # bf16 with f32 accumulation), so the comparison isolates kernel correctness.
    xq = x.astype(jnp.bfloat16).astype(jnp.float32)
    wq = weight.astype(jnp.bfloat16).astype(jnp.float32)
    ref = conv5x5_ref(xq, wq, bias)

    # Forced row_tile=8 exercises the halo'd H-tiling path (2 row tiles / image).
    out_tiled = jax.block_until_ready(conv5x5_pallas(x, weight, bias, row_tile=8))
    assert out_tiled.shape == (n, cout, h, w)
    assert jnp.allclose(out_tiled, ref, atol=2e-3, rtol=2e-3), "tiled mismatch"

    # Auto tile selection (single row tile at this size).
    out_auto = jax.block_until_ready(conv5x5_pallas(x, weight, bias))
    assert jnp.allclose(out_auto, ref, atol=2e-3, rtol=2e-3), "auto mismatch"

    print("KERNEL_OK")
</pallas_src>

<mosaic_0001>
module attributes {stable_mosaic.version = 11 : i64} {
  func.func @_conv5x5_kernel(%arg0: i32, %arg1: i32, %arg2: memref<1x1x12x20x4xbf16, #tpu.memory_space<vmem>>, %arg3: memref<100x8xbf16, #tpu.memory_space<vmem>>, %arg4: memref<1x8xf32, #tpu.memory_space<vmem>>, %arg5: memref<1x1x8x128xf32, #tpu.memory_space<vmem>>) attributes {dimension_semantics = [#tpu.dimension_semantics<parallel>, #tpu.dimension_semantics<parallel>], iteration_bounds = array<i64: 2, 2>, scalar_prefetch = 0 : i64, scratch_operands = 0 : i64, tpu.core_type = #tpu.core_type<tc>, window_params = [{transform_indices = @transform_0, window_bounds = array<i64: 1, 1, 12, 20, 4>}, {pipeline_mode = #tpu.pipeline_mode<synchronous>, transform_indices = @transform_1, window_bounds = array<i64: 100, 8>}, {pipeline_mode = #tpu.pipeline_mode<synchronous>, transform_indices = @transform_2, window_bounds = array<i64: 1, 8>}, {transform_indices = @transform_3, window_bounds = array<i64: 1, 1, 8, 128>}]} {
    %c0 = arith.constant 0 : index
    %c0_0 = arith.constant 0 : index
    %c0_1 = arith.constant 0 : index
    %c0_2 = arith.constant 0 : index
    %c0_3 = arith.constant 0 : index
    %0 = vector.load %arg2[%c0, %c0_0, %c0_1, %c0_2, %c0_3] : memref<1x1x12x20x4xbf16, #tpu.memory_space<vmem>>, vector<1x1x12x20x4xbf16>
    %1 = vector.shape_cast %0 : vector<1x1x12x20x4xbf16> to vector<12x20x4xbf16>
    %2 = vector.extract_strided_slice %1 {offsets = [0, 0, 0], sizes = [8, 16, 4], strides = [1, 1, 1]} : vector<12x20x4xbf16> to vector<8x16x4xbf16>
    %3 = vector.extract_strided_slice %1 {offsets = [0, 1, 0], sizes = [8, 16, 4], strides = [1, 1, 1]} : vector<12x20x4xbf16> to vector<8x16x4xbf16>
    %4 = vector.extract_strided_slice %1 {offsets = [0, 2, 0], sizes = [8, 16, 4], strides = [1, 1, 1]} : vector<12x20x4xbf16> to vector<8x16x4xbf16>
    %5 = vector.extract_strided_slice %1 {offsets = [0, 3, 0], sizes = [8, 16, 4], strides = [1, 1, 1]} : vector<12x20x4xbf16> to vector<8x16x4xbf16>
    %6 = vector.extract_strided_slice %1 {offsets = [0, 4, 0], sizes = [8, 16, 4], strides = [1, 1, 1]} : vector<12x20x4xbf16> to vector<8x16x4xbf16>
    %7 = vector.extract_strided_slice %1 {offsets = [1, 0, 0], sizes = [8, 16, 4], strides = [1, 1, 1]} : vector<12x20x4xbf16> to vector<8x16x4xbf16>
    %8 = vector.extract_strided_slice %1 {offsets = [1, 1, 0], sizes = [8, 16, 4], strides = [1, 1, 1]} : vector<12x20x4xbf16> to vector<8x16x4xbf16>
    %9 = vector.extract_strided_slice %1 {offsets = [1, 2, 0], sizes = [8, 16, 4], strides = [1, 1, 1]} : vector<12x20x4xbf16> to vector<8x16x4xbf16>
    %10 = vector.extract_strided_slice %1 {offsets = [1, 3, 0], sizes = [8, 16, 4], strides = [1, 1, 1]} : vector<12x20x4xbf16> to vector<8x16x4xbf16>
    %11 = vector.extract_strided_slice %1 {offsets = [1, 4, 0], sizes = [8, 16, 4], strides = [1, 1, 1]} : vector<12x20x4xbf16> to vector<8x16x4xbf16>
    %12 = vector.extract_strided_slice %1 {offsets = [2, 0, 0], sizes = [8, 16, 4], strides = [1, 1, 1]} : vector<12x20x4xbf16> to vector<8x16x4xbf16>
    %13 = vector.extract_strided_slice %1 {offsets = [2, 1, 0], sizes = [8, 16, 4], strides = [1, 1, 1]} : vector<12x20x4xbf16> to vector<8x16x4xbf16>
    %14 = vector.extract_strided_slice %1 {offsets = [2, 2, 0], sizes = [8, 16, 4], strides = [1, 1, 1]} : vector<12x20x4xbf16> to vector<8x16x4xbf16>
    %15 = vector.extract_strided_slice %1 {offsets = [2, 3, 0], sizes = [8, 16, 4], strides = [1, 1, 1]} : vector<12x20x4xbf16> to vector<8x16x4xbf16>
    %16 = vector.extract_strided_slice %1 {offsets = [2, 4, 0], sizes = [8, 16, 4], strides = [1, 1, 1]} : vector<12x20x4xbf16> to vector<8x16x4xbf16>
    %17 = vector.extract_strided_slice %1 {offsets = [3, 0, 0], sizes = [8, 16, 4], strides = [1, 1, 1]} : vector<12x20x4xbf16> to vector<8x16x4xbf16>
    %18 = vector.extract_strided_slice %1 {offsets = [3, 1, 0], sizes = [8, 16, 4], strides = [1, 1, 1]} : vector<12x20x4xbf16> to vector<8x16x4xbf16>
    %19 = vector.extract_strided_slice %1 {offsets = [3, 2, 0], sizes = [8, 16, 4], strides = [1, 1, 1]} : vector<12x20x4xbf16> to vector<8x16x4xbf16>
    %20 = vector.extract_strided_slice %1 {offsets = [3, 3, 0], sizes = [8, 16, 4], strides = [1, 1, 1]} : vector<12x20x4xbf16> to vector<8x16x4xbf16>
    %21 = vector.extract_strided_slice %1 {offsets = [3, 4, 0], sizes = [8, 16, 4], strides = [1, 1, 1]} : vector<12x20x4xbf16> to vector<8x16x4xbf16>
    %22 = vector.extract_strided_slice %1 {offsets = [4, 0, 0], sizes = [8, 16, 4], strides = [1, 1, 1]} : vector<12x20x4xbf16> to vector<8x16x4xbf16>
    %23 = vector.extract_strided_slice %1 {offsets = [4, 1, 0], sizes = [8, 16, 4], strides = [1, 1, 1]} : vector<12x20x4xbf16> to vector<8x16x4xbf16>
    %24 = vector.extract_strided_slice %1 {offsets = [4, 2, 0], sizes = [8, 16, 4], strides = [1, 1, 1]} : vector<12x20x4xbf16> to vector<8x16x4xbf16>
    %25 = vector.extract_strided_slice %1 {offsets = [4, 3, 0], sizes = [8, 16, 4], strides = [1, 1, 1]} : vector<12x20x4xbf16> to vector<8x16x4xbf16>
    %26 = vector.extract_strided_slice %1 {offsets = [4, 4, 0], sizes = [8, 16, 4], strides = [1, 1, 1]} : vector<12x20x4xbf16> to vector<8x16x4xbf16>
    %27 = tpu.concatenate %2, %3, %4, %5, %6, %7, %8, %9, %10, %11, %12, %13, %14, %15, %16, %17 in 2 : vector<8x16x4xbf16>, vector<8x16x4xbf16>, vector<8x16x4xbf16>, vector<8x16x4xbf16>, vector<8x16x4xbf16>, vector<8x16x4xbf16>, vector<8x16x4xbf16>, vector<8x16x4xbf16>, vector<8x16x4xbf16>, vector<8x16x4xbf16>, vector<8x16x4xbf16>, vector<8x16x4xbf16>, vector<8x16x4xbf16>, vector<8x16x4xbf16>, vector<8x16x4xbf16>, vector<8x16x4xbf16> -> vector<8x16x64xbf16>
    %28 = tpu.concatenate %18, %19, %20, %21, %22, %23, %24, %25, %26 in 2 : vector<8x16x4xbf16>, vector<8x16x4xbf16>, vector<8x16x4xbf16>, vector<8x16x4xbf16>, vector<8x16x4xbf16>, vector<8x16x4xbf16>, vector<8x16x4xbf16>, vector<8x16x4xbf16>, vector<8x16x4xbf16> -> vector<8x16x36xbf16>
    %29 = tpu.concatenate %27, %28 in 2 : vector<8x16x64xbf16>, vector<8x16x36xbf16> -> vector<8x16x100xbf16>
    %30 = vector.shape_cast %29 : vector<8x16x100xbf16> to vector<128x100xbf16>
    %c0_4 = arith.constant 0 : index
    %c0_5 = arith.constant 0 : index
    %31 = vector.load %arg3[%c0_4, %c0_5] : memref<100x8xbf16, #tpu.memory_space<vmem>>, vector<100x8xbf16>
    %cst = arith.constant dense<0.000000e+00> : vector<128x8xf32>
    %32 = tpu.matmul %30, %31, %cst {dimension_numbers = #tpu.dot_dimension_numbers<[1], [0], [0], [1], [0, 0, 1, 1], [], []>} : vector<128x100xbf16>, vector<100x8xbf16>, vector<128x8xf32> -> vector<128x8xf32>
    %c0_6 = arith.constant 0 : index
    %c0_7 = arith.constant 0 : index
    %33 = vector.load %arg4[%c0_6, %c0_7] : memref<1x8xf32, #tpu.memory_space<vmem>>, vector<1x8xf32>
    %34 = vector.broadcast %33 : vector<1x8xf32> to vector<128x8xf32>
    %35 = arith.addf %32, %34 : vector<128x8xf32>
    %36 = tpu.transpose %35, [1, 0] : vector<128x8xf32> -> vector<8x128xf32>
    %c0_8 = arith.constant 0 : index
    %c0_9 = arith.constant 0 : index
    %c0_10 = arith.constant 0 : index
    %c0_11 = arith.constant 0 : index
    %37 = vector.load %arg5[%c0_8, %c0_9, %c0_10, %c0_11] : memref<1x1x8x128xf32, #tpu.memory_space<vmem>>, vector<1x1x8x128xf32>
    %38 = vector.shape_cast %37 : vector<1x1x8x128xf32> to vector<8x128xf32>
    %39 = vector.shape_cast %36 : vector<8x128xf32> to vector<1x1x8x128xf32>
    tpu.vector_store %arg5[%c0_8, %c0_9, %c0_10, %c0_11], %39 {strides = array<i32>} : memref<1x1x8x128xf32, #tpu.memory_space<vmem>>, vector<1x1x8x128xf32>,
    return
  }
  func.func @transform_0(%arg0: i32, %arg1: i32) -> (i32, i32, i32, i32, i32) {
    %c0_i32 = arith.constant 0 : i32
    %c0_i32_0 = arith.constant 0 : i32
    %c0_i32_1 = arith.constant 0 : i32
    %c0_i32_2 = arith.constant 0 : i32
    return %arg0, %arg1, %c0_i32, %c0_i32_0, %c0_i32_1 : i32, i32, i32, i32, i32
  }
  func.func @transform_1(%arg0: i32, %arg1: i32) -> (i32, i32) {
    %c0_i32 = arith.constant 0 : i32
    %c0_i32_0 = arith.constant 0 : i32
    %c0_i32_1 = arith.constant 0 : i32
    return %c0_i32, %c0_i32_0 : i32, i32
  }
  func.func @transform_2(%arg0: i32, %arg1: i32) -> (i32, i32) {
    %c0_i32 = arith.constant 0 : i32
    %c0_i32_0 = arith.constant 0 : i32
    %c0_i32_1 = arith.constant 0 : i32
    return %c0_i32, %c0_i32_0 : i32, i32
  }
  func.func @transform_3(%arg0: i32, %arg1: i32) -> (i32, i32, i32, i32) {
    %c0_i32 = arith.constant 0 : i32
    %c0_i32_0 = arith.constant 0 : i32
    %c0_i32_1 = arith.constant 0 : i32
    return %arg0, %arg1, %c0_i32, %c0_i32_0 : i32, i32, i32, i32
  }
}

</mosaic_0001>

<llo_original>
// kernel: tpu_custom_call.1
$region0: #{tpu_custom_call.1}
  #allocation0 [shape = 'u32[]', space=smem, size = 0x4, offset = 0x4, fixed_abs, tag = 'smem constant byte address 0x4 - core index']
  #allocation1 [shape = 'u32[144,128]{1,0:T(1,128)}', space=vmem, size = 0x12000, scoped, tag = 'internal scratch']
  %s0 = inlined_call_operand.vmem [shape: bf16[2,2,12,20,4], index: 0, kind: input, shape index: {}]
  %s1 = inlined_call_operand.vmem [shape: bf16[100,8], index: 1, kind: input, shape index: {}]
  %s2 = inlined_call_operand.vmem [shape: f32[1,8], index: 2, kind: input, shape index: {}]
  %s3 = inlined_call_operand.hbm [shape: f32[2,2,8,128], index: 3, kind: output, shape index: {}]
  %s4 = sld [smem:[#allocation0]]
  $region45: #{tpu_custom_call.1} parent=0
    _
  %s6 = ssub.s32 1, %s4
  %s7 = scalar_select 0, %s6, %s4
  $region1: #{tpu_custom_call.1} parent=0
    #allocation2 [shape = 'u8[8192]{0}', space=vmem, size = 0x2000, scoped, tag = 'output window, operand 0']
    #allocation3 [shape = 's32[2]{0}', space=sflag, size = 0x8, scoped, tag = 'scoped memory for tpu_custom_call.1']
    %8 = vsyncpa [#allocation3], 0
    %s9 = scalar_lea.sflag [#allocation3], 1
    %10 = vsyncpa %s9, 0
    loop: start=0, step=1, limit=6
    $region2: #{tpu_custom_call.1} parent=1 // loop_pre_header
      _
    $region3: #{tpu_custom_call.1} parent=1 // loop_header
      %s12 = sphi 0, %s16
      %p13 = scmp.ge.s32.totalorder %s12, 6
      %s19 = sphi 0, %s31
      %s20 = sphi 0, %s27
      %s21 = sphi 0, %s19
      %s22 = sphi 0, %s20
      %s23 = sphi 0, %s21
      %s24 = sphi 0, %s22
      %s36 = sphi 0, %s38
      %s39 = sphi 0, %s36
      %s40 = sphi 0, %s39
      %s56 = sphi 0, %s40
      %s60 = sphi 0, %s60
      %s62 = sphi 0, %s60
      %s63 = sphi 0, %s62
      %s77 = sphi 0, %s63
      %s81 = sphi 0, %s81
      %s83 = sphi 0, %s81
      %s84 = sphi 0, %s83
      %s98 = sphi 0, %s84
      %s106 = sphi 0, %s108
      %s109 = sphi 0, %s106
      %s110 = sphi 0, %s109
      %s126 = sphi 0, %s110
    $region4: #{tpu_custom_call.1} parent=1 // loop_header_branch
      %15 = sbr.rel (%p13) target = $region8
    $region5: #{tpu_custom_call.1} parent=1 // loop_body
      %s17 = ssub.s32 %s12, 1
      %s18 = ssub.s32 %s12, 2
      %s25 = sadd.s32 1, %s20
      %p26 = scmp.ge.s32.totalorder %s25, 2
      %s27 = scalar_select %p26, 0, %s25
      %s28 = sadd.s32 1, %s19
      %s29 = scalar_select %p26, %s28, %s19
      %p30 = scmp.ge.s32.totalorder %s29, 2
      %s31 = scalar_select %p30, 0, %s29
      %s32 = ssub.s32 %s19, %s31
      %s33 = ssub.s32 %s20, %s27
      %s34 = sor.u32 %s32, %s33
      %p35 = scmp.eq.s32.totalorder %s34, 0
      %s37 = sadd.s32 %s36, 1
      %s38 = scalar_select %p35, %s36, %s37
      %p41 = pneg %p35
      %p42 = scmp.eq.s32.totalorder %s12, 3
      %p43 = por %p41, %p42
      %p44 = scmp.ne.s32.totalorder %s36, %s39
      %p45 = scmp.eq.s32.totalorder %s12, 0
      %p46 = por %p44, %p45
      %p47 = scmp.ne.s32.totalorder %s36, %s39
      %p48 = scmp.eq.s32.totalorder %s17, 3
      %p49 = por %p47, %p48
      %p50 = scmp.ne.s32.totalorder %s39, %s40
      %p51 = scmp.eq.s32.totalorder %s17, 0
      %p52 = por %p50, %p51
      %p53 = scmp.ne.s32.totalorder %s39, %s40
      %p54 = scmp.eq.s32.totalorder %s18, 3
      %p55 = por %p53, %p54
      %p57 = scmp.ne.s32.totalorder %s40, %s56
      %p58 = scmp.eq.s32.totalorder %s18, 0
      %p59 = por %p57, %p58
      %s61 = sadd.s32 %s60, 1
      %p64 = scmp.eq.s32.totalorder %s12, 3
      %p65 = scmp.ne.s32.totalorder %s60, %s62
      %p66 = scmp.eq.s32.totalorder %s12, 0
      %p67 = por %p65, %p66
      %p68 = scmp.ne.s32.totalorder %s60, %s62
      %p69 = scmp.eq.s32.totalorder %s17, 3
      %p70 = por %p68, %p69
      %p71 = scmp.ne.s32.totalorder %s62, %s63
      %p72 = scmp.eq.s32.totalorder %s17, 0
      %p73 = por %p71, %p72
      %p74 = scmp.ne.s32.totalorder %s62, %s63
      %p75 = scmp.eq.s32.totalorder %s18, 3
      %p76 = por %p74, %p75
      %p78 = scmp.ne.s32.totalorder %s63, %s77
      %p79 = scmp.eq.s32.totalorder %s18, 0
      %p80 = por %p78, %p79
      %s82 = sadd.s32 %s81, 1
      %p85 = scmp.eq.s32.totalorder %s12, 3
      %p86 = scmp.ne.s32.totalorder %s81, %s83
      %p87 = scmp.eq.s32.totalorder %s12, 0
      %p88 = por %p86, %p87
      %p89 = scmp.ne.s32.totalorder %s81, %s83
      %p90 = scmp.eq.s32.totalorder %s17, 3
      %p91 = por %p89, %p90
      %p92 = scmp.ne.s32.totalorder %s83, %s84
      %p93 = scmp.eq.s32.totalorder %s17, 0
      %p94 = por %p92, %p93
      %p95 = scmp.ne.s32.totalorder %s83, %s84
      %p96 = scmp.eq.s32.totalorder %s18, 3
      %p97 = por %p95, %p96
      %p99 = scmp.ne.s32.totalorder %s84, %s98
      %p100 = scmp.eq.s32.totalorder %s18, 0
      %p101 = por %p99, %p100
      %s102 = ssub.s32 %s19, %s31
      %s103 = ssub.s32 %s20, %s27
      %s104 = sor.u32 %s102, %s103
      %p105 = scmp.eq.s32.totalorder %s104, 0
      %s107 = sadd.s32 %s106, 1
      %s108 = scalar_select %p105, %s106, %s107
      %p111 = pneg %p105
      %p112 = scmp.eq.s32.totalorder %s12, 3
      %p113 = por %p111, %p112
      %p114 = scmp.ne.s32.totalorder %s106, %s109
      %p115 = scmp.eq.s32.totalorder %s12, 0
      %p116 = por %p114, %p115
      %p117 = scmp.ne.s32.totalorder %s106, %s109
      %p118 = scmp.eq.s32.totalorder %s17, 3
      %p119 = por %p117, %p118
      %p120 = scmp.ne.s32.totalorder %s109, %s110
      %p121 = scmp.eq.s32.totalorder %s17, 0
      %p122 = por %p120, %p121
      %p123 = scmp.ne.s32.totalorder %s109, %s110
      %p124 = scmp.eq.s32.totalorder %s18, 3
      %p125 = por %p123, %p124
      %p127 = scmp.ne.s32.totalorder %s110, %s126
      %p128 = scmp.eq.s32.totalorder %s18, 0
      %p129 = por %p127, %p128
      %p130 = scmp.le.s32.totalorder 1, %s12
      %p131 = scmp.lt.s32.totalorder %s12, 5
      %p132 = pnand %p130, %p131
      %p133 = pneg %p132
      // Predicated region
      $region9: #{tpu_custom_call.1} parent=5 // pred_check
        _
      $region10: #{tpu_custom_call.1} parent=5 // pred_check_branch
        %135 = sbr.rel (%p132) target = $region12
      $region11: #{tpu_custom_call.1} parent=5 // pred_region
        %s136 = ssub.s32 %s12, 1
        // Predicated region
        $region13: #{tpu_custom_call.1} parent=11 // pred_check
          %p137 = pneg %p73
        $region14: #{tpu_custom_call.1} parent=11 // pred_check_branch
          %139 = sbr.rel (%p137) target = $region16
        $region15: #{tpu_custom_call.1} parent=11 // pred_region
          _
        $region16: #{tpu_custom_call.1} parent=11 // pred_fallthru
          _
        // Predicated region
        $region17: #{tpu_custom_call.1} parent=11 // pred_check
          %p140 = pneg %p94
        $region18: #{tpu_custom_call.1} parent=11 // pred_check_branch
          %142 = sbr.rel (%p140) target = $region20
        $region19: #{tpu_custom_call.1} parent=11 // pred_region
          _
        $region20: #{tpu_custom_call.1} parent=11 // pred_fallthru
          _
      $region12: #{tpu_custom_call.1} parent=5 // pred_fallthru
        _
      %p143 = scmp.lt.s32.totalorder %s12, 4
      // Predicated region
      $region21: #{tpu_custom_call.1} parent=5 // pred_check
        %p144 = pneg %p143
      $region22: #{tpu_custom_call.1} parent=5 // pred_check_branch
        %146 = sbr.rel (%p144) target = $region24
      $region23: #{tpu_custom_call.1} parent=5 // pred_region
        // Predicated region
        $region25: #{tpu_custom_call.1} parent=23 // pred_check
          %p147 = pneg %p46
        $region26: #{tpu_custom_call.1} parent=23 // pred_check_branch
          %149 = sbr.rel (%p147) target = $region28
        $region27: #{tpu_custom_call.1} parent=23 // pred_region
          %p150 = scmp.lt.s32.totalorder %s19, 1
          %s151 = scalar_select %p150, %s19, 1
          %p152 = scmp.lt.s32.totalorder %s20, 1
          %s153 = scalar_select %p152, %s20, 1
          %s154 = smul.addr %s153, 36
          %s155 = smul.addr %s151, 72
          %s156 = sadd.s32 %s154, %s155
          %s157 = smul.addr %s156, 4
          %s158 = scalar_lea.vmem %s0, %s157
        $region28: #{tpu_custom_call.1} parent=23 // pred_fallthru
          _
      $region24: #{tpu_custom_call.1} parent=5 // pred_fallthru
        _
      %p159 = scmp.le.s32.totalorder 1, %s12
      %p160 = scmp.lt.s32.totalorder %s12, 5
      %p161 = pnand %p159, %p160
      %p162 = pneg %p161
      // Predicated region
      $region29: #{tpu_custom_call.1} parent=5 // pred_check
        _
      $region30: #{tpu_custom_call.1} parent=5 // pred_check_branch
        %164 = sbr.rel (%p161) target = $region32
      $region31: #{tpu_custom_call.1} parent=5 // pred_region
        %s165 = ssub.s32 %s12, 1
        %p166 = scmp.lt.s32.totalorder %s21, 1
        %s167 = scalar_select %p166, %s21, 1
        %p168 = scmp.lt.s32.totalorder %s22, 1
        %s169 = scalar_select %p168, %s22, 1
        %s170 = smul.addr %s169, 36
        %s171 = smul.addr %s167, 72
        %s172 = sadd.s32 %s170, %s171
        %s173 = smul.addr %s172, 4
        %s174 = scalar_lea.vmem %s0, %s173
        %p175 = pneg %p52
        %p176 = pneg %p49
        %p177 = pneg %p73
        %p178 = pneg %p70
        %p179 = pneg %p94
        %p180 = pneg %p91
        %p181 = pneg %p122
        %p182 = pneg %p119
        %s183 = sand.u32 %s109, 1
        %s184 = scalar_lea.sflag [#allocation3], %s183
        %s185 = sand.u32 %s109, 1
        %s186 = smul.addr %s185, 8
        %s187 = scalar_lea.vmem [#allocation2], %s186
        %p188 = scmp.lt.s32.totalorder %s21, 1
        %s189 = scalar_select %p188, %s21, 1
        %p190 = scmp.lt.s32.totalorder %s22, 1
        %s191 = scalar_select %p190, %s22, 1
        %s192 = smul.addr %s191, 36
        %s193 = smul.addr %s189, 72
        %s194 = sadd.s32 %s192, %s193
        %s195 = smul.addr %s194, 4
        %s196 = scalar_lea.vmem %s0, %s195
        %v198 = vld [vmem:[%s196] sm:$0xf]
        %v199 = vld [vmem:[%s196 + $0x4] sm:$0xf]
        %v200 = vld [vmem:[%s196 + $0x8] sm:$0x3]
        %v201 = vld [vmem:[%s196 + $0xc] sm:$0xf]
        %v202 = vld [vmem:[%s196 + $0x10] sm:$0xf]
        %v203 = vld [vmem:[%s196 + $0x14] sm:$0x3]
        %v204 = vld [vmem:[%s196 + $0x18] sm:$0xf]
        %v205 = vld [vmem:[%s196 + $0x1c] sm:$0xf]
        %v206 = vld [vmem:[%s196 + $0x20] sm:$0x3]
        %v207 = vld [vmem:[%s196 + $0x24] sm:$0xf]
        %v208 = vld [vmem:[%s196 + $0x28] sm:$0xf]
        %v209 = vld [vmem:[%s196 + $0x2c] sm:$0x3]
        %v210 = vld [vmem:[%s196 + $0x30] sm:$0xf]
        %v211 = vld [vmem:[%s196 + $0x34] sm:$0xf]
        %v212 = vld [vmem:[%s196 + $0x38] sm:$0x3]
        %v213 = vld [vmem:[%s196 + $0x3c] sm:$0xf]
        %v214 = vld [vmem:[%s196 + $0x40] sm:$0xf]
        %v215 = vld [vmem:[%s196 + $0x44] sm:$0x3]
        %v216 = vld [vmem:[%s196 + $0x48] sm:$0xf]
        %v217 = vld [vmem:[%s196 + $0x4c] sm:$0xf]
        %v218 = vld [vmem:[%s196 + $0x50] sm:$0x3]
        %v219 = vld [vmem:[%s196 + $0x54] sm:$0xf]
        %v220 = vld [vmem:[%s196 + $0x58] sm:$0xf]
        %v221 = vld [vmem:[%s196 + $0x5c] sm:$0x3]
        %v222 = vld [vmem:[%s196 + $0x60] sm:$0xf]
        %v223 = vld [vmem:[%s196 + $0x64] sm:$0xf]
        %v224 = vld [vmem:[%s196 + $0x68] sm:$0x3]
        %v225 = vld [vmem:[%s196 + $0x6c] sm:$0xf]
        %v226 = vld [vmem:[%s196 + $0x70] sm:$0xf]
        %v227 = vld [vmem:[%s196 + $0x74] sm:$0x3]
        %v228 = vld [vmem:[%s196 + $0x78] sm:$0xf]
        %v229 = vld [vmem:[%s196 + $0x7c] sm:$0xf]
        %v230 = vld [vmem:[%s196 + $0x80] sm:$0x3]
        %v231 = vld [vmem:[%s196 + $0x84] sm:$0xf]
        %v232 = vld [vmem:[%s196 + $0x88] sm:$0xf]
        %v233 = vld [vmem:[%s196 + $0x8c] sm:$0x3]
        %v250 = vunpack.c.l.b16 %v198
        %v251 = vunpack.c.l.b16 %v199
        %v252 = vunpack.c.l.b16 %v201
        %v253 = vunpack.c.l.b16 %v202
        %v254 = vunpack.c.l.b16 %v204
        %v255 = vunpack.c.l.b16 %v205
        %v256 = vunpack.c.l.b16 %v207
        %v257 = vunpack.c.l.b16 %v208
        %v258 = vunpack.c.l.b16 %v210
        %v259 = vunpack.c.l.b16 %v211
        %v260 = vunpack.c.l.b16 %v213
        %v261 = vunpack.c.l.b16 %v214
        %v262 = vunpack.c.l.b16 %v216
        %v263 = vunpack.c.l.b16 %v217
        %v264 = vunpack.c.l.b16 %v219
        %v265 = vunpack.c.l.b16 %v220
        %v266 = vpack.c.b16 %v251, %v250
        %v267 = vpack.c.b16 %v253, %v252
        %v268 = vpack.c.b16 %v255, %v254
        %v269 = vpack.c.b16 %v257, %v256
        %v270 = vpack.c.b16 %v259, %v258
        %v271 = vpack.c.b16 %v261, %v260
        %v272 = vpack.c.b16 %v263, %v262
        %v273 = vpack.c.b16 %v265, %v264
        %v282 = vunpack.c.l.b16 %v200
        %v283 = vunpack.c.l.b16 %v203
        %v284 = vunpack.c.l.b16 %v206
        %v285 = vunpack.c.l.b16 %v209
        %v286 = vunpack.c.l.b16 %v212
        %v287 = vunpack.c.l.b16 %v215
        %v288 = vunpack.c.l.b16 %v218
        %v289 = vunpack.c.l.b16 %v221
        %v290 = vpack.c.b16 %v282, %v282
        %v291 = vpack.c.b16 %v283, %v283
        %v292 = vpack.c.b16 %v284, %v284
        %v293 = vpack.c.b16 %v285, %v285
        %v294 = vpack.c.b16 %v286, %v286
        %v295 = vpack.c.b16 %v287, %v287
        %v296 = vpack.c.b16 %v288, %v288
        %v297 = vpack.c.b16 %v289, %v289
        %vm298 = vsmask.f32 7424
        %v300 = vshrl.u32 %v266, 16
        %v302 = vshll.u32 %v266, 16
        %v304 = vrot.slane %v302, 1
        %v305 = vor.u32 %v300, %v304
        %v307 = vshll.u32 %v290, 16
        %v309 = vrot.slane %v307, 1
        %v310 = vsel %vm298, %v305, %v309
        %v312 = vshrl.u32 %v267, 16
        %v314 = vshll.u32 %v267, 16
        %v316 = vrot.slane %v314, 1
        %v317 = vor.u32 %v312, %v316
        %v319 = vshll.u32 %v291, 16
        %v321 = vrot.slane %v319, 1
        %v322 = vsel %vm298, %v317, %v321
        %v324 = vshrl.u32 %v268, 16
        %v326 = vshll.u32 %v268, 16
        %v328 = vrot.slane %v326, 1
        %v329 = vor.u32 %v324, %v328
        %v331 = vshll.u32 %v292, 16
        %v333 = vrot.slane %v331, 1
        %v334 = vsel %vm298, %v329, %v333
        %v336 = vshrl.u32 %v269, 16
        %v338 = vshll.u32 %v269, 16
        %v340 = vrot.slane %v338, 1
        %v341 = vor.u32 %v336, %v340
        %v343 = vshll.u32 %v293, 16
        %v345 = vrot.slane %v343, 1
        %v346 = vsel %vm298, %v341, %v345
        %v348 = vshrl.u32 %v270, 16
        %v350 = vshll.u32 %v270, 16
        %v352 = vrot.slane %v350, 1
        %v353 = vor.u32 %v348, %v352
        %v355 = vshll.u32 %v294, 16
        %v357 = vrot.slane %v355, 1
        %v358 = vsel %vm298, %v353, %v357
        %v360 = vshrl.u32 %v271, 16
        %v362 = vshll.u32 %v271, 16
        %v364 = vrot.slane %v362, 1
        %v365 = vor.u32 %v360, %v364
        %v367 = vshll.u32 %v295, 16
        %v369 = vrot.slane %v367, 1
        %v370 = vsel %vm298, %v365, %v369
        %v372 = vshrl.u32 %v272, 16
        %v374 = vshll.u32 %v272, 16
        %v376 = vrot.slane %v374, 1
        %v377 = vor.u32 %v372, %v376
        %v379 = vshll.u32 %v296, 16
        %v381 = vrot.slane %v379, 1
        %v382 = vsel %vm298, %v377, %v381
        %v384 = vshrl.u32 %v273, 16
        %v386 = vshll.u32 %v273, 16
        %v388 = vrot.slane %v386, 1
        %v389 = vor.u32 %v384, %v388
        %v391 = vshll.u32 %v297, 16
        %v393 = vrot.slane %v391, 1
        %v394 = vsel %vm298, %v389, %v393
        %395 = vrot.lane.b32.xlu0 %v310, 4
        %v396 = vpop.permute.xlu0 %395
        %397 = vrot.lane.b32.xlu0 %v322, 4
        %v398 = vpop.permute.xlu0 %397
        %399 = vrot.lane.b32.xlu0 %v334, 4
        %v400 = vpop.permute.xlu0 %399
        %401 = vrot.lane.b32.xlu0 %v346, 4
        %v402 = vpop.permute.xlu0 %401
        %403 = vrot.lane.b32.xlu0 %v358, 4
        %v404 = vpop.permute.xlu0 %403
        %405 = vrot.lane.b32.xlu0 %v370, 4
        %v406 = vpop.permute.xlu0 %405
        %407 = vrot.lane.b32.xlu0 %v382, 4
        %v408 = vpop.permute.xlu0 %407
        %409 = vrot.lane.b32.xlu0 %v394, 4
        %v410 = vpop.permute.xlu0 %409
        %vm411 = vcmask 1046528
        %v412 = vrot.slane %v266, 1
        %v413 = vrot.slane %v290, 1
        %v414 = vsel %vm411, %v412, %v413
        %v415 = vrot.slane %v267, 1
        %v416 = vrot.slane %v291, 1
        %v417 = vsel %vm411, %v415, %v416
        %v418 = vrot.slane %v268, 1
        %v419 = vrot.slane %v292, 1
        %v420 = vsel %vm411, %v418, %v419
        %v421 = vrot.slane %v269, 1
        %v422 = vrot.slane %v293, 1
        %v423 = vsel %vm411, %v421, %v422
        %v424 = vrot.slane %v270, 1
        %v425 = vrot.slane %v294, 1
        %v426 = vsel %vm411, %v424, %v425
        %v427 = vrot.slane %v271, 1
        %v428 = vrot.slane %v295, 1
        %v429 = vsel %vm411, %v427, %v428
        %v430 = vrot.slane %v272, 1
        %v431 = vrot.slane %v296, 1
        %v432 = vsel %vm411, %v430, %v431
        %v433 = vrot.slane %v273, 1
        %v434 = vrot.slane %v297, 1
        %v435 = vsel %vm411, %v433, %v434
        %436 = vrot.lane.b32.xlu0 %v414, 8
        %v437 = vpop.permute.xlu0 %436
        %438 = vrot.lane.b32.xlu0 %v417, 8
        %v439 = vpop.permute.xlu0 %438
        %440 = vrot.lane.b32.xlu0 %v420, 8
        %v441 = vpop.permute.xlu0 %440
        %442 = vrot.lane.b32.xlu0 %v423, 8
        %v443 = vpop.permute.xlu0 %442
        %444 = vrot.lane.b32.xlu0 %v426, 8
        %v445 = vpop.permute.xlu0 %444
        %446 = vrot.lane.b32.xlu0 %v429, 8
        %v447 = vpop.permute.xlu0 %446
        %448 = vrot.lane.b32.xlu0 %v432, 8
        %v449 = vpop.permute.xlu0 %448
        %450 = vrot.lane.b32.xlu0 %v435, 8
        %v451 = vpop.permute.xlu0 %450
        %vm452 = vsmask.f32 6400
        %v453 = vrot.slane %v300, 1
        %v454 = vrot.slane %v302, 2
        %v455 = vor.u32 %v453, %v454
        %v456 = vshrl.u32 %v290, 16
        %v458 = vrot.slane %v456, 1
        %v459 = vrot.slane %v307, 2
        %v460 = vor.u32 %v458, %v459
        %v461 = vsel %vm452, %v455, %v460
        %v462 = vrot.slane %v312, 1
        %v463 = vrot.slane %v314, 2
        %v464 = vor.u32 %v462, %v463
        %v465 = vshrl.u32 %v291, 16
        %v467 = vrot.slane %v465, 1
        %v468 = vrot.slane %v319, 2
        %v469 = vor.u32 %v467, %v468
        %v470 = vsel %vm452, %v464, %v469
        %v471 = vrot.slane %v324, 1
        %v472 = vrot.slane %v326, 2
        %v473 = vor.u32 %v471, %v472
        %v474 = vshrl.u32 %v292, 16
        %v476 = vrot.slane %v474, 1
        %v477 = vrot.slane %v331, 2
        %v478 = vor.u32 %v476, %v477
        %v479 = vsel %vm452, %v473, %v478
        %v480 = vrot.slane %v336, 1
        %v481 = vrot.slane %v338, 2
        %v482 = vor.u32 %v480, %v481
        %v483 = vshrl.u32 %v293, 16
        %v485 = vrot.slane %v483, 1
        %v486 = vrot.slane %v343, 2
        %v487 = vor.u32 %v485, %v486
        %v488 = vsel %vm452, %v482, %v487
        %v489 = vrot.slane %v348, 1
        %v490 = vrot.slane %v350, 2
        %v491 = vor.u32 %v489, %v490
        %v492 = vshrl.u32 %v294, 16
        %v494 = vrot.slane %v492, 1
        %v495 = vrot.slane %v355, 2
        %v496 = vor.u32 %v494, %v495
        %v497 = vsel %vm452, %v491, %v496
        %v498 = vrot.slane %v360, 1
        %v499 = vrot.slane %v362, 2
        %v500 = vor.u32 %v498, %v499
        %v501 = vshrl.u32 %v295, 16
        %v503 = vrot.slane %v501, 1
        %v504 = vrot.slane %v367, 2
        %v505 = vor.u32 %v503, %v504
        %v506 = vsel %vm452, %v500, %v505
        %v507 = vrot.slane %v372, 1
        %v508 = vrot.slane %v374, 2
        %v509 = vor.u32 %v507, %v508
        %v510 = vshrl.u32 %v296, 16
        %v512 = vrot.slane %v510, 1
        %v513 = vrot.slane %v379, 2
        %v514 = vor.u32 %v512, %v513
        %v515 = vsel %vm452, %v509, %v514
        %v516 = vrot.slane %v384, 1
        %v517 = vrot.slane %v386, 2
        %v518 = vor.u32 %v516, %v517
        %v519 = vshrl.u32 %v297, 16
        %v521 = vrot.slane %v519, 1
        %v522 = vrot.slane %v391, 2
        %v523 = vor.u32 %v521, %v522
        %v524 = vsel %vm452, %v518, %v523
        %525 = vrot.lane.b32.xlu0 %v461, 12
        %v526 = vpop.permute.xlu0 %525
        %527 = vrot.lane.b32.xlu0 %v470, 12
        %v528 = vpop.permute.xlu0 %527
        %529 = vrot.lane.b32.xlu0 %v479, 12
        %v530 = vpop.permute.xlu0 %529
        %531 = vrot.lane.b32.xlu0 %v488, 12
        %v532 = vpop.permute.xlu0 %531
        %533 = vrot.lane.b32.xlu0 %v497, 12
        %v534 = vpop.permute.xlu0 %533
        %535 = vrot.lane.b32.xlu0 %v506, 12
        %v536 = vpop.permute.xlu0 %535
        %537 = vrot.lane.b32.xlu0 %v515, 12
        %v538 = vpop.permute.xlu0 %537
        %539 = vrot.lane.b32.xlu0 %v524, 12
        %v540 = vpop.permute.xlu0 %539
        %vm541 = vcmask 1045504
        %v542 = vrot.slane %v266, 2
        %v543 = vrot.slane %v290, 2
        %v544 = vsel %vm541, %v542, %v543
        %v545 = vrot.slane %v267, 2
        %v546 = vrot.slane %v291, 2
        %v547 = vsel %vm541, %v545, %v546
        %v548 = vrot.slane %v268, 2
        %v549 = vrot.slane %v292, 2
        %v550 = vsel %vm541, %v548, %v549
        %v551 = vrot.slane %v269, 2
        %v552 = vrot.slane %v293, 2
        %v553 = vsel %vm541, %v551, %v552
        %v554 = vrot.slane %v270, 2
        %v555 = vrot.slane %v294, 2
        %v556 = vsel %vm541, %v554, %v555
        %v557 = vrot.slane %v271, 2
        %v558 = vrot.slane %v295, 2
        %v559 = vsel %vm541, %v557, %v558
        %v560 = vrot.slane %v272, 2
        %v561 = vrot.slane %v296, 2
        %v562 = vsel %vm541, %v560, %v561
        %v563 = vrot.slane %v273, 2
        %v564 = vrot.slane %v297, 2
        %v565 = vsel %vm541, %v563, %v564
        %566 = vrot.lane.b32.xlu0 %v544, 16
        %v567 = vpop.permute.xlu0 %566
        %568 = vrot.lane.b32.xlu0 %v547, 16
        %v569 = vpop.permute.xlu0 %568
        %570 = vrot.lane.b32.xlu0 %v550, 16
        %v571 = vpop.permute.xlu0 %570
        %572 = vrot.lane.b32.xlu0 %v553, 16
        %v573 = vpop.permute.xlu0 %572
        %574 = vrot.lane.b32.xlu0 %v556, 16
        %v575 = vpop.permute.xlu0 %574
        %576 = vrot.lane.b32.xlu0 %v559, 16
        %v577 = vpop.permute.xlu0 %576
        %578 = vrot.lane.b32.xlu0 %v562, 16
        %v579 = vpop.permute.xlu0 %578
        %580 = vrot.lane.b32.xlu0 %v565, 16
        %v581 = vpop.permute.xlu0 %580
        %v584 = vunpack.c.l.b16 %v222
        %v585 = vunpack.c.l.b16 %v223
        %v586 = vpack.c.b16 %v585, %v584
        %587 = vrot.lane.b32.xlu0 %v267, 20
        %v588 = vpop.permute.xlu0 %587
        %589 = vrot.lane.b32.xlu0 %v268, 20
        %v590 = vpop.permute.xlu0 %589
        %591 = vrot.lane.b32.xlu0 %v269, 20
        %v592 = vpop.permute.xlu0 %591
        %593 = vrot.lane.b32.xlu0 %v270, 20
        %v594 = vpop.permute.xlu0 %593
        %595 = vrot.lane.b32.xlu0 %v271, 20
        %v596 = vpop.permute.xlu0 %595
        %597 = vrot.lane.b32.xlu0 %v272, 20
        %v598 = vpop.permute.xlu0 %597
        %599 = vrot.lane.b32.xlu0 %v273, 20
        %v600 = vpop.permute.xlu0 %599
        %601 = vrot.lane.b32.xlu0 %v586, 20
        %v602 = vpop.permute.xlu0 %601
        %v604 = vunpack.c.l.b16 %v224
        %v605 = vpack.c.b16 %v604, %v604
        %v607 = vshrl.u32 %v586, 16
        %v609 = vshll.u32 %v586, 16
        %v611 = vrot.slane %v609, 1
        %v612 = vor.u32 %v607, %v611
        %v614 = vshll.u32 %v605, 16
        %v616 = vrot.slane %v614, 1
        %v617 = vsel %vm298, %v612, %v616
        %618 = vrot.lane.b32.xlu0 %v322, 24
        %v619 = vpop.permute.xlu0 %618
        %620 = vrot.lane.b32.xlu0 %v334, 24
        %v621 = vpop.permute.xlu0 %620
        %622 = vrot.lane.b32.xlu0 %v346, 24
        %v623 = vpop.permute.xlu0 %622
        %624 = vrot.lane.b32.xlu0 %v358, 24
        %v625 = vpop.permute.xlu0 %624
        %626 = vrot.lane.b32.xlu0 %v370, 24
        %v627 = vpop.permute.xlu0 %626
        %628 = vrot.lane.b32.xlu0 %v382, 24
        %v629 = vpop.permute.xlu0 %628
        %630 = vrot.lane.b32.xlu0 %v394, 24
        %v631 = vpop.permute.xlu0 %630
        %632 = vrot.lane.b32.xlu0 %v617, 24
        %v633 = vpop.permute.xlu0 %632
        %v634 = vrot.slane %v586, 1
        %v635 = vrot.slane %v605, 1
        %v636 = vsel %vm411, %v634, %v635
        %637 = vrot.lane.b32.xlu0 %v417, 28
        %v638 = vpop.permute.xlu0 %637
        %639 = vrot.lane.b32.xlu0 %v420, 28
        %v640 = vpop.permute.xlu0 %639
        %641 = vrot.lane.b32.xlu0 %v423, 28
        %v642 = vpop.permute.xlu0 %641
        %643 = vrot.lane.b32.xlu0 %v426, 28
        %v644 = vpop.permute.xlu0 %643
        %645 = vrot.lane.b32.xlu0 %v429, 28
        %v646 = vpop.permute.xlu0 %645
        %647 = vrot.lane.b32.xlu0 %v432, 28
        %v648 = vpop.permute.xlu0 %647
        %649 = vrot.lane.b32.xlu0 %v435, 28
        %v650 = vpop.permute.xlu0 %649
        %651 = vrot.lane.b32.xlu0 %v636, 28
        %v652 = vpop.permute.xlu0 %651
        %v653 = vrot.slane %v607, 1
        %v654 = vrot.slane %v609, 2
        %v655 = vor.u32 %v653, %v654
        %v656 = vshrl.u32 %v605, 16
        %v658 = vrot.slane %v656, 1
        %v659 = vrot.slane %v614, 2
        %v660 = vor.u32 %v658, %v659
        %v661 = vsel %vm452, %v655, %v660
        %662 = vrot.lane.b32.xlu0 %v470, 32
        %v663 = vpop.permute.xlu0 %662
        %664 = vrot.lane.b32.xlu0 %v479, 32
        %v665 = vpop.permute.xlu0 %664
        %666 = vrot.lane.b32.xlu0 %v488, 32
        %v667 = vpop.permute.xlu0 %666
        %668 = vrot.lane.b32.xlu0 %v497, 32
        %v669 = vpop.permute.xlu0 %668
        %670 = vrot.lane.b32.xlu0 %v506, 32
        %v671 = vpop.permute.xlu0 %670
        %672 = vrot.lane.b32.xlu0 %v515, 32
        %v673 = vpop.permute.xlu0 %672
        %674 = vrot.lane.b32.xlu0 %v524, 32
        %v675 = vpop.permute.xlu0 %674
        %676 = vrot.lane.b32.xlu0 %v661, 32
        %v677 = vpop.permute.xlu0 %676
        %v678 = vrot.slane %v586, 2
        %v679 = vrot.slane %v605, 2
        %v680 = vsel %vm541, %v678, %v679
        %681 = vrot.lane.b32.xlu0 %v547, 36
        %v682 = vpop.permute.xlu0 %681
        %683 = vrot.lane.b32.xlu0 %v550, 36
        %v684 = vpop.permute.xlu0 %683
        %685 = vrot.lane.b32.xlu0 %v553, 36
        %v686 = vpop.permute.xlu0 %685
        %687 = vrot.lane.b32.xlu0 %v556, 36
        %v688 = vpop.permute.xlu0 %687
        %689 = vrot.lane.b32.xlu0 %v559, 36
        %v690 = vpop.permute.xlu0 %689
        %691 = vrot.lane.b32.xlu0 %v562, 36
        %v692 = vpop.permute.xlu0 %691
        %693 = vrot.lane.b32.xlu0 %v565, 36
        %v694 = vpop.permute.xlu0 %693
        %695 = vrot.lane.b32.xlu0 %v680, 36
        %v696 = vpop.permute.xlu0 %695
        %v699 = vunpack.c.l.b16 %v225
        %v700 = vunpack.c.l.b16 %v226
        %v701 = vpack.c.b16 %v700, %v699
        %702 = vrot.lane.b32.xlu0 %v268, 40
        %v703 = vpop.permute.xlu0 %702
        %704 = vrot.lane.b32.xlu0 %v269, 40
        %v705 = vpop.permute.xlu0 %704
        %706 = vrot.lane.b32.xlu0 %v270, 40
        %v707 = vpop.permute.xlu0 %706
        %708 = vrot.lane.b32.xlu0 %v271, 40
        %v709 = vpop.permute.xlu0 %708
        %710 = vrot.lane.b32.xlu0 %v272, 40
        %v711 = vpop.permute.xlu0 %710
        %712 = vrot.lane.b32.xlu0 %v273, 40
        %v713 = vpop.permute.xlu0 %712
        %714 = vrot.lane.b32.xlu0 %v586, 40
        %v715 = vpop.permute.xlu0 %714
        %716 = vrot.lane.b32.xlu0 %v701, 40
        %v717 = vpop.permute.xlu0 %716
        %v719 = vunpack.c.l.b16 %v227
        %v720 = vpack.c.b16 %v719, %v719
        %v722 = vshrl.u32 %v701, 16
        %v724 = vshll.u32 %v701, 16
        %v726 = vrot.slane %v724, 1
        %v727 = vor.u32 %v722, %v726
        %v729 = vshll.u32 %v720, 16
        %v731 = vrot.slane %v729, 1
        %v732 = vsel %vm298, %v727, %v731
        %733 = vrot.lane.b32.xlu0 %v334, 44
        %v734 = vpop.permute.xlu0 %733
        %735 = vrot.lane.b32.xlu0 %v346, 44
        %v736 = vpop.permute.xlu0 %735
        %737 = vrot.lane.b32.xlu0 %v358, 44
        %v738 = vpop.permute.xlu0 %737
        %739 = vrot.lane.b32.xlu0 %v370, 44
        %v740 = vpop.permute.xlu0 %739
        %741 = vrot.lane.b32.xlu0 %v382, 44
        %v742 = vpop.permute.xlu0 %741
        %743 = vrot.lane.b32.xlu0 %v394, 44
        %v744 = vpop.permute.xlu0 %743
        %745 = vrot.lane.b32.xlu0 %v617, 44
        %v746 = vpop.permute.xlu0 %745
        %747 = vrot.lane.b32.xlu0 %v732, 44
        %v748 = vpop.permute.xlu0 %747
        %v749 = vrot.slane %v701, 1
        %v750 = vrot.slane %v720, 1
        %v751 = vsel %vm411, %v749, %v750
        %752 = vrot.lane.b32.xlu0 %v420, 48
        %v753 = vpop.permute.xlu0 %752
        %754 = vrot.lane.b32.xlu0 %v423, 48
        %v755 = vpop.permute.xlu0 %754
        %756 = vrot.lane.b32.xlu0 %v426, 48
        %v757 = vpop.permute.xlu0 %756
        %758 = vrot.lane.b32.xlu0 %v429, 48
        %v759 = vpop.permute.xlu0 %758
        %760 = vrot.lane.b32.xlu0 %v432, 48
        %v761 = vpop.permute.xlu0 %760
        %762 = vrot.lane.b32.xlu0 %v435, 48
        %v763 = vpop.permute.xlu0 %762
        %764 = vrot.lane.b32.xlu0 %v636, 48
        %v765 = vpop.permute.xlu0 %764
        %766 = vrot.lane.b32.xlu0 %v751, 48
        %v767 = vpop.permute.xlu0 %766
        %v768 = vrot.slane %v722, 1
        %v769 = vrot.slane %v724, 2
        %v770 = vor.u32 %v768, %v769
        %v771 = vshrl.u32 %v720, 16
        %v773 = vrot.slane %v771, 1
        %v774 = vrot.slane %v729, 2
        %v775 = vor.u32 %v773, %v774
        %v776 = vsel %vm452, %v770, %v775
        %777 = vrot.lane.b32.xlu0 %v479, 52
        %v778 = vpop.permute.xlu0 %777
        %779 = vrot.lane.b32.xlu0 %v488, 52
        %v780 = vpop.permute.xlu0 %779
        %781 = vrot.lane.b32.xlu0 %v497, 52
        %v782 = vpop.permute.xlu0 %781
        %783 = vrot.lane.b32.xlu0 %v506, 52
        %v784 = vpop.permute.xlu0 %783
        %785 = vrot.lane.b32.xlu0 %v515, 52
        %v786 = vpop.permute.xlu0 %785
        %787 = vrot.lane.b32.xlu0 %v524, 52
        %v788 = vpop.permute.xlu0 %787
        %789 = vrot.lane.b32.xlu0 %v661, 52
        %v790 = vpop.permute.xlu0 %789
        %791 = vrot.lane.b32.xlu0 %v776, 52
        %v792 = vpop.permute.xlu0 %791
        %v793 = vrot.slane %v701, 2
        %v794 = vrot.slane %v720, 2
        %v795 = vsel %vm541, %v793, %v794
        %796 = vrot.lane.b32.xlu0 %v550, 56
        %v797 = vpop.permute.xlu0 %796
        %798 = vrot.lane.b32.xlu0 %v553, 56
        %v799 = vpop.permute.xlu0 %798
        %800 = vrot.lane.b32.xlu0 %v556, 56
        %v801 = vpop.permute.xlu0 %800
        %802 = vrot.lane.b32.xlu0 %v559, 56
        %v803 = vpop.permute.xlu0 %802
        %804 = vrot.lane.b32.xlu0 %v562, 56
        %v805 = vpop.permute.xlu0 %804
        %806 = vrot.lane.b32.xlu0 %v565, 56
        %v807 = vpop.permute.xlu0 %806
        %808 = vrot.lane.b32.xlu0 %v680, 56
        %v809 = vpop.permute.xlu0 %808
        %810 = vrot.lane.b32.xlu0 %v795, 56
        %v811 = vpop.permute.xlu0 %810
        %v814 = vunpack.c.l.b16 %v228
        %v815 = vunpack.c.l.b16 %v229
        %v816 = vpack.c.b16 %v815, %v814
        %817 = vrot.lane.b32.xlu0 %v269, 60
        %v818 = vpop.permute.xlu0 %817
        %819 = vrot.lane.b32.xlu0 %v270, 60
        %v820 = vpop.permute.xlu0 %819
        %821 = vrot.lane.b32.xlu0 %v271, 60
        %v822 = vpop.permute.xlu0 %821
        %823 = vrot.lane.b32.xlu0 %v272, 60
        %v824 = vpop.permute.xlu0 %823
        %825 = vrot.lane.b32.xlu0 %v273, 60
        %v826 = vpop.permute.xlu0 %825
        %827 = vrot.lane.b32.xlu0 %v586, 60
        %v828 = vpop.permute.xlu0 %827
        %829 = vrot.lane.b32.xlu0 %v701, 60
        %v830 = vpop.permute.xlu0 %829
        %831 = vrot.lane.b32.xlu0 %v816, 60
        %v832 = vpop.permute.xlu0 %831
        %vm833 = vcmask 31744
        %v835 = vsel %vm833, %v266, %v396
        %v837 = vsel %vm833, %v267, %v398
        %v839 = vsel %vm833, %v268, %v400
        %v841 = vsel %vm833, %v269, %v402
        %v843 = vsel %vm833, %v270, %v404
        %v845 = vsel %vm833, %v271, %v406
        %v847 = vsel %vm833, %v272, %v408
        %v849 = vsel %vm833, %v273, %v410
        %vm850 = vcmask 64512
        %v852 = vsel %vm850, %v835, %v437
        %v854 = vsel %vm850, %v837, %v439
        %v856 = vsel %vm850, %v839, %v441
        %v858 = vsel %vm850, %v841, %v443
        %v860 = vsel %vm850, %v843, %v445
        %v862 = vsel %vm850, %v845, %v447
        %v864 = vsel %vm850, %v847, %v449
        %v866 = vsel %vm850, %v849, %v451
        %vm867 = vcmask 97280
        %v869 = vsel %vm867, %v852, %v526
        %v871 = vsel %vm867, %v854, %v528
        %v873 = vsel %vm867, %v856, %v530
        %v875 = vsel %vm867, %v858, %v532
        %v877 = vsel %vm867, %v860, %v534
        %v879 = vsel %vm867, %v862, %v536
        %v881 = vsel %vm867, %v864, %v538
        %v883 = vsel %vm867, %v866, %v540
        %vm884 = vcmask 130048
        %v886 = vsel %vm884, %v869, %v567
        %v888 = vsel %vm884, %v871, %v569
        %v890 = vsel %vm884, %v873, %v571
        %v892 = vsel %vm884, %v875, %v573
        %v894 = vsel %vm884, %v877, %v575
        %v896 = vsel %vm884, %v879, %v577
        %v898 = vsel %vm884, %v881, %v579
        %v900 = vsel %vm884, %v883, %v581
        %vm901 = vcmask 162816
        %v903 = vsel %vm901, %v886, %v588
        %v905 = vsel %vm901, %v888, %v590
        %v907 = vsel %vm901, %v890, %v592
        %v909 = vsel %vm901, %v892, %v594
        %v911 = vsel %vm901, %v894, %v596
        %v913 = vsel %vm901, %v896, %v598
        %v915 = vsel %vm901, %v898, %v600
        %v917 = vsel %vm901, %v900, %v602
        %vm918 = vcmask 195584
        %v920 = vsel %vm918, %v903, %v619
        %v922 = vsel %vm918, %v905, %v621
        %v924 = vsel %vm918, %v907, %v623
        %v926 = vsel %vm918, %v909, %v625
        %v928 = vsel %vm918, %v911, %v627
        %v930 = vsel %vm918, %v913, %v629
        %v932 = vsel %vm918, %v915, %v631
        %v934 = vsel %vm918, %v917, %v633
        %vm935 = vcmask 228352
        %v937 = vsel %vm935, %v920, %v638
        %v939 = vsel %vm935, %v922, %v640
        %v941 = vsel %vm935, %v924, %v642
        %v943 = vsel %vm935, %v926, %v644
        %v945 = vsel %vm935, %v928, %v646
        %v947 = vsel %vm935, %v930, %v648
        %v949 = vsel %vm935, %v932, %v650
        %v951 = vsel %vm935, %v934, %v652
        %vm952 = vcmask 261120
        %v954 = vsel %vm952, %v937, %v663
        %v956 = vsel %vm952, %v939, %v665
        %v958 = vsel %vm952, %v941, %v667
        %v960 = vsel %vm952, %v943, %v669
        %v962 = vsel %vm952, %v945, %v671
        %v964 = vsel %vm952, %v947, %v673
        %v966 = vsel %vm952, %v949, %v675
        %v968 = vsel %vm952, %v951, %v677
        %vm969 = vcmask 293888
        %v971 = vsel %vm969, %v954, %v682
        %v973 = vsel %vm969, %v956, %v684
        %v975 = vsel %vm969, %v958, %v686
        %v977 = vsel %vm969, %v960, %v688
        %v979 = vsel %vm969, %v962, %v690
        %v981 = vsel %vm969, %v964, %v692
        %v983 = vsel %vm969, %v966, %v694
        %v985 = vsel %vm969, %v968, %v696
        %vm986 = vcmask 326656
        %v988 = vsel %vm986, %v971, %v703
        %v990 = vsel %vm986, %v973, %v705
        %v992 = vsel %vm986, %v975, %v707
        %v994 = vsel %vm986, %v977, %v709
        %v996 = vsel %vm986, %v979, %v711
        %v998 = vsel %vm986, %v981, %v713
        %v1000 = vsel %vm986, %v983, %v715
        %v1002 = vsel %vm986, %v985, %v717
        %vm1003 = vcmask 359424
        %v1005 = vsel %vm1003, %v988, %v734
        %v1007 = vsel %vm1003, %v990, %v736
        %v1009 = vsel %vm1003, %v992, %v738
        %v1011 = vsel %vm1003, %v994, %v740
        %v1013 = vsel %vm1003, %v996, %v742
        %v1015 = vsel %vm1003, %v998, %v744
        %v1017 = vsel %vm1003, %v1000, %v746
        %v1019 = vsel %vm1003, %v1002, %v748
        %vm1020 = vcmask 392192
        %v1022 = vsel %vm1020, %v1005, %v753
        %v1024 = vsel %vm1020, %v1007, %v755
        %v1026 = vsel %vm1020, %v1009, %v757
        %v1028 = vsel %vm1020, %v1011, %v759
        %v1030 = vsel %vm1020, %v1013, %v761
        %v1032 = vsel %vm1020, %v1015, %v763
        %v1034 = vsel %vm1020, %v1017, %v765
        %v1036 = vsel %vm1020, %v1019, %v767
        %vm1037 = vcmask 424960
        %v1039 = vsel %vm1037, %v1022, %v778
        %v1041 = vsel %vm1037, %v1024, %v780
        %v1043 = vsel %vm1037, %v1026, %v782
        %v1045 = vsel %vm1037, %v1028, %v784
        %v1047 = vsel %vm1037, %v1030, %v786
        %v1049 = vsel %vm1037, %v1032, %v788
        %v1051 = vsel %vm1037, %v1034, %v790
        %v1053 = vsel %vm1037, %v1036, %v792
        %vm1054 = vcmask 457728
        %v1056 = vsel %vm1054, %v1039, %v797
        %v1058 = vsel %vm1054, %v1041, %v799
        %v1060 = vsel %vm1054, %v1043, %v801
        %v1062 = vsel %vm1054, %v1045, %v803
        %v1064 = vsel %vm1054, %v1047, %v805
        %v1066 = vsel %vm1054, %v1049, %v807
        %v1068 = vsel %vm1054, %v1051, %v809
        %v1070 = vsel %vm1054, %v1053, %v811
        %vm1071 = vcmask 490496
        %v1073 = vsel %vm1071, %v1056, %v818
        %v1075 = vsel %vm1071, %v1058, %v820
        %v1077 = vsel %vm1071, %v1060, %v822
        %v1079 = vsel %vm1071, %v1062, %v824
        %v1081 = vsel %vm1071, %v1064, %v826
        %v1083 = vsel %vm1071, %v1066, %v828
        %v1085 = vsel %vm1071, %v1068, %v830
        %v1087 = vsel %vm1071, %v1070, %v832
        %v1089 = vunpack.c.l.b16 %v230
        %v1090 = vpack.c.b16 %v1089, %v1089
        %v1092 = vshrl.u32 %v816, 16
        %v1094 = vshll.u32 %v816, 16
        %v1096 = vrot.slane %v1094, 1
        %v1097 = vor.u32 %v1092, %v1096
        %v1099 = vshll.u32 %v1090, 16
        %v1101 = vrot.slane %v1099, 1
        %v1102 = vsel %vm298, %v1097, %v1101
        %v1103 = vshrl.u32 %v1090, 16
        %1105 = vrot.lane.b32.xlu0 %v483, 4
        %v1106 = vpop.permute.xlu0 %1105
        %1107 = vrot.lane.b32.xlu0 %v492, 4
        %v1108 = vpop.permute.xlu0 %1107
        %1109 = vrot.lane.b32.xlu0 %v501, 4
        %v1110 = vpop.permute.xlu0 %1109
        %1111 = vrot.lane.b32.xlu0 %v510, 4
        %v1112 = vpop.permute.xlu0 %1111
        %1113 = vrot.lane.b32.xlu0 %v519, 4
        %v1114 = vpop.permute.xlu0 %1113
        %1115 = vrot.lane.b32.xlu0 %v617, 4
        %v1116 = vpop.permute.xlu0 %1115
        %1117 = vrot.lane.b32.xlu0 %v656, 4
        %v1118 = vpop.permute.xlu0 %1117
        %1119 = vrot.lane.b32.xlu0 %v732, 4
        %v1120 = vpop.permute.xlu0 %1119
        %1121 = vrot.lane.b32.xlu0 %v771, 4
        %v1122 = vpop.permute.xlu0 %1121
        %1123 = vrot.lane.b32.xlu0 %v1102, 4
        %v1124 = vpop.permute.xlu0 %1123
        %1125 = vrot.lane.b32.xlu0 %v1103, 4
        %v1126 = vpop.permute.xlu0 %1125
        %v1127 = vrot.slane %v816, 1
        %v1128 = vrot.slane %v1090, 1
        %v1129 = vsel %vm411, %v1127, %v1128
        %1130 = vrot.lane.b32.xlu0 %v422, 8
        %v1131 = vpop.permute.xlu0 %1130
        %1132 = vrot.lane.b32.xlu0 %v425, 8
        %v1133 = vpop.permute.xlu0 %1132
        %1134 = vrot.lane.b32.xlu0 %v428, 8
        %v1135 = vpop.permute.xlu0 %1134
        %1136 = vrot.lane.b32.xlu0 %v431, 8
        %v1137 = vpop.permute.xlu0 %1136
        %1138 = vrot.lane.b32.xlu0 %v434, 8
        %v1139 = vpop.permute.xlu0 %1138
        %1140 = vrot.lane.b32.xlu0 %v636, 8
        %v1141 = vpop.permute.xlu0 %1140
        %1142 = vrot.lane.b32.xlu0 %v635, 8
        %v1143 = vpop.permute.xlu0 %1142
        %1144 = vrot.lane.b32.xlu0 %v751, 8
        %v1145 = vpop.permute.xlu0 %1144
        %1146 = vrot.lane.b32.xlu0 %v750, 8
        %v1147 = vpop.permute.xlu0 %1146
        %1148 = vrot.lane.b32.xlu0 %v1129, 8
        %v1149 = vpop.permute.xlu0 %1148
        %1150 = vrot.lane.b32.xlu0 %v1128, 8
        %v1151 = vpop.permute.xlu0 %1150
        %v1152 = vrot.slane %v1092, 1
        %v1153 = vrot.slane %v1094, 2
        %v1154 = vor.u32 %v1152, %v1153
        %v1155 = vrot.slane %v1103, 1
        %v1156 = vrot.slane %v1099, 2
        %v1157 = vor.u32 %v1155, %v1156
        %v1158 = vsel %vm452, %v1154, %v1157
        %1159 = vrot.lane.b32.xlu0 %v485, 12
        %v1160 = vpop.permute.xlu0 %1159
        %1161 = vrot.lane.b32.xlu0 %v494, 12
        %v1162 = vpop.permute.xlu0 %1161
        %1163 = vrot.lane.b32.xlu0 %v503, 12
        %v1164 = vpop.permute.xlu0 %1163
        %1165 = vrot.lane.b32.xlu0 %v512, 12
        %v1166 = vpop.permute.xlu0 %1165
        %1167 = vrot.lane.b32.xlu0 %v521, 12
        %v1168 = vpop.permute.xlu0 %1167
        %1169 = vrot.lane.b32.xlu0 %v661, 12
        %v1170 = vpop.permute.xlu0 %1169
        %1171 = vrot.lane.b32.xlu0 %v658, 12
        %v1172 = vpop.permute.xlu0 %1171
        %1173 = vrot.lane.b32.xlu0 %v776, 12
        %v1174 = vpop.permute.xlu0 %1173
        %1175 = vrot.lane.b32.xlu0 %v773, 12
        %v1176 = vpop.permute.xlu0 %1175
        %1177 = vrot.lane.b32.xlu0 %v1158, 12
        %v1178 = vpop.permute.xlu0 %1177
        %1179 = vrot.lane.b32.xlu0 %v1155, 12
        %v1180 = vpop.permute.xlu0 %1179
        %v1183 = vunpack.c.l.b16 %v231
        %v1184 = vunpack.c.l.b16 %v232
        %v1185 = vpack.c.b16 %v1184, %v1183
        %v1186 = vrot.slane %v348, 7
        %v1187 = vor.u32 %v1186, %v350
        %v1188 = vrot.slane %v360, 7
        %v1189 = vor.u32 %v1188, %v362
        %v1190 = vrot.slane %v372, 7
        %v1191 = vor.u32 %v1190, %v374
        %v1192 = vrot.slane %v384, 7
        %v1193 = vor.u32 %v1192, %v386
        %v1194 = vrot.slane %v607, 7
        %v1195 = vor.u32 %v1194, %v609
        %v1196 = vrot.slane %v722, 7
        %v1197 = vor.u32 %v1196, %v724
        %v1198 = vrot.slane %v1092, 7
        %v1199 = vor.u32 %v1198, %v1094
        %v1201 = vshrl.u32 %v1185, 16
        %v1203 = vrot.slane %v1201, 7
        %v1204 = vshll.u32 %v1185, 16
        %v1206 = vor.u32 %v1203, %v1204
        %1207 = vrot.lane.b32.xlu0 %v1187, 16
        %v1208 = vpop.permute.xlu0 %1207
        %1209 = vrot.lane.b32.xlu0 %v1186, 16
        %v1210 = vpop.permute.xlu0 %1209
        %1211 = vrot.lane.b32.xlu0 %v1189, 16
        %v1212 = vpop.permute.xlu0 %1211
        %1213 = vrot.lane.b32.xlu0 %v1188, 16
        %v1214 = vpop.permute.xlu0 %1213
        %1215 = vrot.lane.b32.xlu0 %v1191, 16
        %v1216 = vpop.permute.xlu0 %1215
        %1217 = vrot.lane.b32.xlu0 %v1190, 16
        %v1218 = vpop.permute.xlu0 %1217
        %1219 = vrot.lane.b32.xlu0 %v1193, 16
        %v1220 = vpop.permute.xlu0 %1219
        %1221 = vrot.lane.b32.xlu0 %v1192, 16
        %v1222 = vpop.permute.xlu0 %1221
        %1223 = vrot.lane.b32.xlu0 %v1195, 16
        %v1224 = vpop.permute.xlu0 %1223
        %1225 = vrot.lane.b32.xlu0 %v1194, 16
        %v1226 = vpop.permute.xlu0 %1225
        %1227 = vrot.lane.b32.xlu0 %v1197, 16
        %v1228 = vpop.permute.xlu0 %1227
        %1229 = vrot.lane.b32.xlu0 %v1196, 16
        %v1230 = vpop.permute.xlu0 %1229
        %1231 = vrot.lane.b32.xlu0 %v1199, 16
        %v1232 = vpop.permute.xlu0 %1231
        %1233 = vrot.lane.b32.xlu0 %v1198, 16
        %v1234 = vpop.permute.xlu0 %1233
        %1235 = vrot.lane.b32.xlu0 %v1206, 16
        %v1236 = vpop.permute.xlu0 %1235
        %1237 = vrot.lane.b32.xlu0 %v1203, 16
        %v1238 = vpop.permute.xlu0 %1237
        %v1240 = vunpack.c.l.b16 %v233
        %v1241 = vpack.c.b16 %v1240, %v1240
        %1242 = vrot.lane.b32.xlu0 %v294, 20
        %v1243 = vpop.permute.xlu0 %1242
        %1244 = vrot.lane.b32.xlu0 %v295, 20
        %v1245 = vpop.permute.xlu0 %1244
        %1246 = vrot.lane.b32.xlu0 %v296, 20
        %v1247 = vpop.permute.xlu0 %1246
        %1248 = vrot.lane.b32.xlu0 %v297, 20
        %v1249 = vpop.permute.xlu0 %1248
        %1250 = vrot.lane.b32.xlu0 %v605, 20
        %v1251 = vpop.permute.xlu0 %1250
        %1252 = vrot.lane.b32.xlu0 %v701, 20
        %v1253 = vpop.permute.xlu0 %1252
        %1254 = vrot.lane.b32.xlu0 %v720, 20
        %v1255 = vpop.permute.xlu0 %1254
        %1256 = vrot.lane.b32.xlu0 %v816, 20
        %v1257 = vpop.permute.xlu0 %1256
        %1258 = vrot.lane.b32.xlu0 %v1090, 20
        %v1259 = vpop.permute.xlu0 %1258
        %1260 = vrot.lane.b32.xlu0 %v1185, 20
        %v1261 = vpop.permute.xlu0 %1260
        %1262 = vrot.lane.b32.xlu0 %v1241, 20
        %v1263 = vpop.permute.xlu0 %1262
        %v1264 = vrot.slane %v1204, 1
        %v1265 = vor.u32 %v1201, %v1264
        %v1267 = vshll.u32 %v1241, 16
        %v1269 = vrot.slane %v1267, 1
        %v1270 = vsel %vm298, %v1265, %v1269
        %v1271 = vshrl.u32 %v1241, 16
        %1273 = vrot.lane.b32.xlu0 %v492, 24
        %v1274 = vpop.permute.xlu0 %1273
        %1275 = vrot.lane.b32.xlu0 %v501, 24
        %v1276 = vpop.permute.xlu0 %1275
        %1277 = vrot.lane.b32.xlu0 %v510, 24
        %v1278 = vpop.permute.xlu0 %1277
        %1279 = vrot.lane.b32.xlu0 %v519, 24
        %v1280 = vpop.permute.xlu0 %1279
        %1281 = vrot.lane.b32.xlu0 %v656, 24
        %v1282 = vpop.permute.xlu0 %1281
        %1283 = vrot.lane.b32.xlu0 %v732, 24
        %v1284 = vpop.permute.xlu0 %1283
        %1285 = vrot.lane.b32.xlu0 %v771, 24
        %v1286 = vpop.permute.xlu0 %1285
        %1287 = vrot.lane.b32.xlu0 %v1102, 24
        %v1288 = vpop.permute.xlu0 %1287
        %1289 = vrot.lane.b32.xlu0 %v1103, 24
        %v1290 = vpop.permute.xlu0 %1289
        %1291 = vrot.lane.b32.xlu0 %v1270, 24
        %v1292 = vpop.permute.xlu0 %1291
        %1293 = vrot.lane.b32.xlu0 %v1271, 24
        %v1294 = vpop.permute.xlu0 %1293
        %v1295 = vrot.slane %v1185, 1
        %v1296 = vrot.slane %v1241, 1
        %v1297 = vsel %vm411, %v1295, %v1296
        %1298 = vrot.lane.b32.xlu0 %v425, 28
        %v1299 = vpop.permute.xlu0 %1298
        %1300 = vrot.lane.b32.xlu0 %v428, 28
        %v1301 = vpop.permute.xlu0 %1300
        %1302 = vrot.lane.b32.xlu0 %v431, 28
        %v1303 = vpop.permute.xlu0 %1302
        %1304 = vrot.lane.b32.xlu0 %v434, 28
        %v1305 = vpop.permute.xlu0 %1304
        %1306 = vrot.lane.b32.xlu0 %v635, 28
        %v1307 = vpop.permute.xlu0 %1306
        %1308 = vrot.lane.b32.xlu0 %v751, 28
        %v1309 = vpop.permute.xlu0 %1308
        %1310 = vrot.lane.b32.xlu0 %v750, 28
        %v1311 = vpop.permute.xlu0 %1310
        %1312 = vrot.lane.b32.xlu0 %v1129, 28
        %v1313 = vpop.permute.xlu0 %1312
        %1314 = vrot.lane.b32.xlu0 %v1128, 28
        %v1315 = vpop.permute.xlu0 %1314
        %1316 = vrot.lane.b32.xlu0 %v1297, 28
        %v1317 = vpop.permute.xlu0 %1316
        %1318 = vrot.lane.b32.xlu0 %v1296, 28
        %v1319 = vpop.permute.xlu0 %1318
        %v1320 = vrot.slane %v1201, 1
        %v1321 = vrot.slane %v1204, 2
        %v1322 = vor.u32 %v1320, %v1321
        %v1323 = vrot.slane %v1271, 1
        %v1324 = vrot.slane %v1267, 2
        %v1325 = vor.u32 %v1323, %v1324
        %v1326 = vsel %vm452, %v1322, %v1325
        %1327 = vrot.lane.b32.xlu0 %v494, 32
        %v1328 = vpop.permute.xlu0 %1327
        %1329 = vrot.lane.b32.xlu0 %v503, 32
        %v1330 = vpop.permute.xlu0 %1329
        %1331 = vrot.lane.b32.xlu0 %v512, 32
        %v1332 = vpop.permute.xlu0 %1331
        %1333 = vrot.lane.b32.xlu0 %v521, 32
        %v1334 = vpop.permute.xlu0 %1333
        %1335 = vrot.lane.b32.xlu0 %v658, 32
        %v1336 = vpop.permute.xlu0 %1335
        %1337 = vrot.lane.b32.xlu0 %v776, 32
        %v1338 = vpop.permute.xlu0 %1337
        %1339 = vrot.lane.b32.xlu0 %v773, 32
        %v1340 = vpop.permute.xlu0 %1339
        %1341 = vrot.lane.b32.xlu0 %v1158, 32
        %v1342 = vpop.permute.xlu0 %1341
        %1343 = vrot.lane.b32.xlu0 %v1155, 32
        %v1344 = vpop.permute.xlu0 %1343
        %1345 = vrot.lane.b32.xlu0 %v1326, 32
        %v1346 = vpop.permute.xlu0 %1345
        %1347 = vrot.lane.b32.xlu0 %v1323, 32
        %v1348 = vpop.permute.xlu0 %1347
        %v1350 = vsel %vm833, %v293, %v1106
        %v1352 = vsel %vm833, %v294, %v1108
        %v1354 = vsel %vm833, %v295, %v1110
        %v1356 = vsel %vm833, %v296, %v1112
        %v1358 = vsel %vm833, %v297, %v1114
        %v1360 = vsel %vm833, %v586, %v1116
        %v1362 = vsel %vm833, %v605, %v1118
        %v1364 = vsel %vm833, %v701, %v1120
        %v1366 = vsel %vm833, %v720, %v1122
        %v1368 = vsel %vm833, %v816, %v1124
        %v1370 = vsel %vm833, %v1090, %v1126
        %v1372 = vsel %vm850, %v1350, %v1131
        %v1374 = vsel %vm850, %v1352, %v1133
        %v1376 = vsel %vm850, %v1354, %v1135
        %v1378 = vsel %vm850, %v1356, %v1137
        %v1380 = vsel %vm850, %v1358, %v1139
        %v1382 = vsel %vm850, %v1360, %v1141
        %v1384 = vsel %vm850, %v1362, %v1143
        %v1386 = vsel %vm850, %v1364, %v1145
        %v1388 = vsel %vm850, %v1366, %v1147
        %v1390 = vsel %vm850, %v1368, %v1149
        %v1392 = vsel %vm850, %v1370, %v1151
        %v1394 = vsel %vm867, %v1372, %v1160
        %v1396 = vsel %vm867, %v1374, %v1162
        %v1398 = vsel %vm867, %v1376, %v1164
        %v1400 = vsel %vm867, %v1378, %v1166
        %v1402 = vsel %vm867, %v1380, %v1168
        %v1404 = vsel %vm867, %v1382, %v1170
        %v1406 = vsel %vm867, %v1384, %v1172
        %v1408 = vsel %vm867, %v1386, %v1174
        %v1410 = vsel %vm867, %v1388, %v1176
        %v1412 = vsel %vm867, %v1390, %v1178
        %v1414 = vsel %vm867, %v1392, %v1180
        %v1416 = vsel %vm884, %v875, %v1208
        %v1418 = vsel %vm884, %v1394, %v1210
        %v1420 = vsel %vm884, %v877, %v1212
        %v1422 = vsel %vm884, %v1396, %v1214
        %v1424 = vsel %vm884, %v879, %v1216
        %v1426 = vsel %vm884, %v1398, %v1218
        %v1428 = vsel %vm884, %v881, %v1220
        %v1430 = vsel %vm884, %v1400, %v1222
        %v1432 = vsel %vm884, %v883, %v1224
        %v1434 = vsel %vm884, %v1402, %v1226
        %v1436 = vsel %vm884, %v1404, %v1228
        %v1438 = vsel %vm884, %v1406, %v1230
        %v1440 = vsel %vm884, %v1408, %v1232
        %v1442 = vsel %vm884, %v1410, %v1234
        %v1444 = vsel %vm884, %v1412, %v1236
        %v1446 = vsel %vm884, %v1414, %v1238
        %v1447 = vsel %vm901, %v1416, %v594
        %v1449 = vsel %vm901, %v1418, %v1243
        %v1450 = vsel %vm901, %v1420, %v596
        %v1452 = vsel %vm901, %v1422, %v1245
        %v1453 = vsel %vm901, %v1424, %v598
        %v1455 = vsel %vm901, %v1426, %v1247
        %v1456 = vsel %vm901, %v1428, %v600
        %v1458 = vsel %vm901, %v1430, %v1249
        %v1459 = vsel %vm901, %v1432, %v602
        %v1461 = vsel %vm901, %v1434, %v1251
        %v1463 = vsel %vm901, %v1436, %v1253
        %v1465 = vsel %vm901, %v1438, %v1255
        %v1467 = vsel %vm901, %v1440, %v1257
        %v1469 = vsel %vm901, %v1442, %v1259
        %v1471 = vsel %vm901, %v1444, %v1261
        %v1473 = vsel %vm901, %v1446, %v1263
        %v1474 = vsel %vm918, %v1447, %v625
        %v1476 = vsel %vm918, %v1449, %v1274
        %v1477 = vsel %vm918, %v1450, %v627
        %v1479 = vsel %vm918, %v1452, %v1276
        %v1480 = vsel %vm918, %v1453, %v629
        %v1482 = vsel %vm918, %v1455, %v1278
        %v1483 = vsel %vm918, %v1456, %v631
        %v1485 = vsel %vm918, %v1458, %v1280
        %v1486 = vsel %vm918, %v1459, %v633
        %v1488 = vsel %vm918, %v1461, %v1282
        %v1490 = vsel %vm918, %v1463, %v1284
        %v1492 = vsel %vm918, %v1465, %v1286
        %v1494 = vsel %vm918, %v1467, %v1288
        %v1496 = vsel %vm918, %v1469, %v1290
        %v1498 = vsel %vm918, %v1471, %v1292
        %v1500 = vsel %vm918, %v1473, %v1294
        %v1501 = vsel %vm935, %v1474, %v644
        %v1503 = vsel %vm935, %v1476, %v1299
        %v1504 = vsel %vm935, %v1477, %v646
        %v1506 = vsel %vm935, %v1479, %v1301
        %v1507 = vsel %vm935, %v1480, %v648
        %v1509 = vsel %vm935, %v1482, %v1303
        %v1510 = vsel %vm935, %v1483, %v650
        %v1512 = vsel %vm935, %v1485, %v1305
        %v1513 = vsel %vm935, %v1486, %v652
        %v1515 = vsel %vm935, %v1488, %v1307
        %v1517 = vsel %vm935, %v1490, %v1309
        %v1519 = vsel %vm935, %v1492, %v1311
        %v1521 = vsel %vm935, %v1494, %v1313
        %v1523 = vsel %vm935, %v1496, %v1315
        %v1525 = vsel %vm935, %v1498, %v1317
        %v1527 = vsel %vm935, %v1500, %v1319
        %v1528 = vsel %vm952, %v1501, %v669
        %v1530 = vsel %vm952, %v1503, %v1328
        %v1531 = vsel %vm952, %v1504, %v671
        %v1533 = vsel %vm952, %v1506, %v1330
        %v1534 = vsel %vm952, %v1507, %v673
        %v1536 = vsel %vm952, %v1509, %v1332
        %v1537 = vsel %vm952, %v1510, %v675
        %v1539 = vsel %vm952, %v1512, %v1334
        %v1540 = vsel %vm952, %v1513, %v677
        %v1542 = vsel %vm952, %v1515, %v1336
        %v1544 = vsel %vm952, %v1517, %v1338
        %v1546 = vsel %vm952, %v1519, %v1340
        %v1548 = vsel %vm952, %v1521, %v1342
        %v1550 = vsel %vm952, %v1523, %v1344
        %v1552 = vsel %vm952, %v1525, %v1346
        %v1554 = vsel %vm952, %v1527, %v1348
        %v1555 = vshrl.u32 %v1528, 16
        %v1557 = vshll.u32 %v1528, 16
        %v1559 = vrot.slane %v1557, 1
        %v1560 = vor.u32 %v1555, %v1559
        %v1561 = vshll.u32 %v1530, 16
        %v1563 = vrot.slane %v1561, 1
        %v1564 = vsel %vm298, %v1560, %v1563
        %v1565 = vshrl.u32 %v1531, 16
        %v1567 = vshll.u32 %v1531, 16
        %v1569 = vrot.slane %v1567, 1
        %v1570 = vor.u32 %v1565, %v1569
        %v1571 = vshll.u32 %v1533, 16
        %v1573 = vrot.slane %v1571, 1
        %v1574 = vsel %vm298, %v1570, %v1573
        %v1575 = vshrl.u32 %v1534, 16
        %v1577 = vshll.u32 %v1534, 16
        %v1579 = vrot.slane %v1577, 1
        %v1580 = vor.u32 %v1575, %v1579
        %v1581 = vshll.u32 %v1536, 16
        %v1583 = vrot.slane %v1581, 1
        %v1584 = vsel %vm298, %v1580, %v1583
        %v1585 = vshrl.u32 %v1537, 16
        %v1587 = vshll.u32 %v1537, 16
        %v1589 = vrot.slane %v1587, 1
        %v1590 = vor.u32 %v1585, %v1589
        %v1591 = vshll.u32 %v1539, 16
        %v1593 = vrot.slane %v1591, 1
        %v1594 = vsel %vm298, %v1590, %v1593
        %v1595 = vshrl.u32 %v1540, 16
        %v1597 = vshll.u32 %v1540, 16
        %v1599 = vrot.slane %v1597, 1
        %v1600 = vor.u32 %v1595, %v1599
        %v1601 = vshll.u32 %v1542, 16
        %v1603 = vrot.slane %v1601, 1
        %v1604 = vsel %vm298, %v1600, %v1603
        %v1605 = vshrl.u32 %v1544, 16
        %v1607 = vshll.u32 %v1544, 16
        %v1609 = vrot.slane %v1607, 1
        %v1610 = vor.u32 %v1605, %v1609
        %v1611 = vshll.u32 %v1546, 16
        %v1613 = vrot.slane %v1611, 1
        %v1614 = vsel %vm298, %v1610, %v1613
        %v1615 = vshrl.u32 %v1548, 16
        %v1617 = vshll.u32 %v1548, 16
        %v1619 = vrot.slane %v1617, 1
        %v1620 = vor.u32 %v1615, %v1619
        %v1621 = vshll.u32 %v1550, 16
        %v1623 = vrot.slane %v1621, 1
        %v1624 = vsel %vm298, %v1620, %v1623
        %v1625 = vshrl.u32 %v1552, 16
        %v1627 = vshll.u32 %v1552, 16
        %v1629 = vrot.slane %v1627, 1
        %v1630 = vor.u32 %v1625, %v1629
        %v1631 = vshll.u32 %v1554, 16
        %v1633 = vrot.slane %v1631, 1
        %v1634 = vsel %vm298, %v1630, %v1633
        %1635 = vrot.lane.b32.xlu0 %v1564, 64
        %v1636 = vpop.permute.xlu0 %1635
        %1637 = vrot.lane.b32.xlu0 %v1574, 64
        %v1638 = vpop.permute.xlu0 %1637
        %1639 = vrot.lane.b32.xlu0 %v1584, 64
        %v1640 = vpop.permute.xlu0 %1639
        %1641 = vrot.lane.b32.xlu0 %v1594, 64
        %v1642 = vpop.permute.xlu0 %1641
        %1643 = vrot.lane.b32.xlu0 %v1604, 64
        %v1644 = vpop.permute.xlu0 %1643
        %1645 = vrot.lane.b32.xlu0 %v1614, 64
        %v1646 = vpop.permute.xlu0 %1645
        %1647 = vrot.lane.b32.xlu0 %v1624, 64
        %v1648 = vpop.permute.xlu0 %1647
        %1649 = vrot.lane.b32.xlu0 %v1634, 64
        %v1650 = vpop.permute.xlu0 %1649
        %vm1651 = vcmask 523264
        %v1653 = vsel %vm1651, %v1073, %v1636
        %v1655 = vsel %vm1651, %v1075, %v1638
        %v1657 = vsel %vm1651, %v1077, %v1640
        %v1659 = vsel %vm1651, %v1079, %v1642
        %v1661 = vsel %vm1651, %v1081, %v1644
        %v1663 = vsel %vm1651, %v1083, %v1646
        %v1665 = vsel %vm1651, %v1085, %v1648
        %v1667 = vsel %vm1651, %v1087, %v1650
        %v1668 = vld [vmem:[%s1] sm:$0xf]
        %v1669 = vld [vmem:[%s1 + $0x4] sm:$0xf]
        %v1670 = vld [vmem:[%s1 + $0x8] sm:$0xf]
        %v1671 = vld [vmem:[%s1 + $0xc] sm:$0xf]
        %v1672 = vld [vmem:[%s1 + $0x10] sm:$0xf]
        %v1673 = vld [vmem:[%s1 + $0x14] sm:$0xf]
        %v1674 = vld [vmem:[%s1 + $0x18] sm:$0xf]
        %v1675 = vld [vmem:[%s1 + $0x1c] sm:$0xf]
        %v1676 = vld [vmem:[%s1 + $0x20] sm:$0xf]
        %v1677 = vld [vmem:[%s1 + $0x24] sm:$0xf]
        %v1678 = vld [vmem:[%s1 + $0x28] sm:$0xf]
        %v1679 = vld [vmem:[%s1 + $0x2c] sm:$0xf]
        %v1680 = vld [vmem:[%s1 + $0x30] sm:$0x3]
        %v1681 = vld [vmem:[%s2] sm:$0x1]
        %v1683 = vlaneseq
        %v1684 = vshrl.u32 %v1683, 7
        %v1685 = vsub.s32 0, %v1684
        %v1686 = vrot.slane %v1681, %v1685
        %v1701 = vunpack.c.l.b16 %v1668
        %v1702 = vunpack.c.l.b16 %v1669
        %v1703 = vunpack.c.l.b16 %v1670
        %v1704 = vunpack.c.l.b16 %v1671
        %v1705 = vunpack.c.l.b16 %v1672
        %v1706 = vunpack.c.l.b16 %v1673
        %v1707 = vunpack.c.l.b16 %v1674
        %v1708 = vunpack.c.l.b16 %v1675
        %v1709 = vunpack.c.l.b16 %v1676
        %v1710 = vunpack.c.l.b16 %v1677
        %v1711 = vunpack.c.l.b16 %v1678
        %v1712 = vunpack.c.l.b16 %v1679
        %v1713 = vunpack.c.l.b16 %v1680
        %v1714 = vpack.c.b16 %v1702, %v1701
        %v1715 = vpack.c.b16 %v1704, %v1703
        %v1716 = vpack.c.b16 %v1706, %v1705
        %v1717 = vpack.c.b16 %v1708, %v1707
        %v1718 = vpack.c.b16 %v1710, %v1709
        %v1719 = vpack.c.b16 %v1712, %v1711
        %v1720 = vpack.c.b16 %v1713, %v1713
        %vm1727 = vcmask 818176
        %v1728 = vsel %vm1727, %v1653, 0
        %v1730 = vsel %vm1727, %v1655, 0
        %v1732 = vsel %vm1727, %v1657, 0
        %v1734 = vsel %vm1727, %v1659, 0
        %v1736 = vsel %vm1727, %v1661, 0
        %v1738 = vsel %vm1727, %v1663, 0
        %v1740 = vsel %vm1727, %v1665, 0
        %v1742 = vsel %vm1727, %v1667, 0
        %vm1744 = vcmask 1041408
        %v1746 = vsel %vm1744, %v1720, 0
        %1748 = vmatprep.subr.bf16.mxu0 0
        %1749 = vmatpush1.bf16.msra.mxu0 0
        %1750 = vmatprep.subr.bf16.mxu0 0
        %1751 = vmatpush1.bf16.msra.mxu0 %v1746
        %1752 = vmatprep.subr.bf16.mxu0 0
        %1753 = vmatpush1.bf16.msra.mxu0 %v1719
        %1754 = vmatprep.subr.bf16.mxu0 0
        %1755 = vmatpush1.bf16.msra.mxu0 %v1718
        %1756 = vmatprep.subr.bf16.mxu0 0
        %1757 = vmatpush1.bf16.msra.mxu0 %v1717
        %1758 = vmatprep.subr.bf16.mxu0 0
        %1759 = vmatpush1.bf16.msra.mxu0 %v1716
        %1760 = vmatprep.subr.bf16.mxu0 0
        %1761 = vmatpush1.bf16.msra.mxu0 %v1715
        %1762 = vmatprep.subr.bf16.mxu0 0
        %1763 = vmatpush1.bf16.msra.mxu0 %v1714
        %1764 = vmatprep.subr.bf16.mxu0 0
        %1765 = vmatpush2.bf16.msra.mxu0 0
        %1766 = vmatprep.subr.bf16.mxu0 0
        %1767 = vmatpush2.bf16.msra.mxu0 0
        %1768 = vmatprep.subr.bf16.mxu0 0
        %1769 = vmatpush2.bf16.msra.mxu0 0
        %1770 = vmatprep.subr.bf16.mxu0 0
        %1771 = vmatpush2.bf16.msra.mxu0 0
        %1772 = vmatprep.subr.bf16.mxu0 0
        %1773 = vmatpush2.bf16.msra.mxu0 0
        %1774 = vmatprep.subr.bf16.mxu0 0
        %1775 = vmatpush2.bf16.msra.mxu0 0
        %1776 = vmatprep.subr.bf16.mxu0 0
        %1777 = vmatpush2.bf16.msra.mxu0 0
        %1778 = vmatprep.subr.bf16.mxu0 0
        %1779 = vmatpush2.bf16.msra.mxu0 0
        %1780 = vmatprep.mubr.bf16.mxu0 0
        %1781 = vmatmul.mubr.bf16.gmra.mxu0 %v1728
        %v1782 = vpop.f32.mrf.mxu0
        %v1783 = vadd.f32 %v1686, %v1782
        %v1784 = vpop.f32.mrf.mxu0
        %v1785 = vpop.f32.mrf.mxu0
        %v1786 = vadd.f32 %v1686, %v1785
        %v1787 = vpop.f32.mrf.mxu0
        %1788 = vmatprep.mubr.bf16.mxu0 0
        %1789 = vmatmul.mubr.bf16.gmra.mxu0 %v1730
        %v1790 = vpop.f32.mrf.mxu0
        %v1791 = vadd.f32 %v1686, %v1790
        %v1792 = vpop.f32.mrf.mxu0
        %v1793 = vpop.f32.mrf.mxu0
        %v1794 = vadd.f32 %v1686, %v1793
        %v1795 = vpop.f32.mrf.mxu0
        %1796 = vmatprep.mubr.bf16.mxu0 0
        %1797 = vmatmul.mubr.bf16.gmra.mxu0 %v1732
        %v1798 = vpop.f32.mrf.mxu0
        %v1799 = vadd.f32 %v1686, %v1798
        %v1800 = vpop.f32.mrf.mxu0
        %v1801 = vpop.f32.mrf.mxu0
        %v1802 = vadd.f32 %v1686, %v1801
        %v1803 = vpop.f32.mrf.mxu0
        %1804 = vmatprep.mubr.bf16.mxu0 0
        %1805 = vmatmul.mubr.bf16.gmra.mxu0 %v1734
        %v1806 = vpop.f32.mrf.mxu0
        %v1807 = vadd.f32 %v1686, %v1806
        %v1808 = vpop.f32.mrf.mxu0
        %v1809 = vpop.f32.mrf.mxu0
        %v1810 = vadd.f32 %v1686, %v1809
        %v1811 = vpop.f32.mrf.mxu0
        %1812 = vmatprep.mubr.bf16.mxu0 0
        %1813 = vmatmul.mubr.bf16.gmra.mxu0 %v1736
        %v1814 = vpop.f32.mrf.mxu0
        %v1815 = vadd.f32 %v1686, %v1814
        %v1816 = vpop.f32.mrf.mxu0
        %v1817 = vpop.f32.mrf.mxu0
        %v1818 = vadd.f32 %v1686, %v1817
        %v1819 = vpop.f32.mrf.mxu0
        %1820 = vmatprep.mubr.bf16.mxu0 0
        %1821 = vmatmul.mubr.bf16.gmra.mxu0 %v1738
        %v1822 = vpop.f32.mrf.mxu0
        %v1823 = vadd.f32 %v1686, %v1822
        %v1824 = vpop.f32.mrf.mxu0
        %v1825 = vpop.f32.mrf.mxu0
        %v1826 = vadd.f32 %v1686, %v1825
        %v1827 = vpop.f32.mrf.mxu0
        %1828 = vmatprep.mubr.bf16.mxu0 0
        %1829 = vmatmul.mubr.bf16.gmra.mxu0 %v1740
        %v1830 = vpop.f32.mrf.mxu0
        %v1831 = vadd.f32 %v1686, %v1830
        %v1832 = vpop.f32.mrf.mxu0
        %v1833 = vpop.f32.mrf.mxu0
        %v1834 = vadd.f32 %v1686, %v1833
        %v1835 = vpop.f32.mrf.mxu0
        %1836 = vmatprep.mubr.bf16.mxu0 0
        %1837 = vmatmul.mubr.bf16.gmra.mxu0 %v1742
        %v1838 = vpop.f32.mrf.mxu0
        %v1839 = vadd.f32 %v1686, %v1838
        %v1840 = vpop.f32.mrf.mxu0
        %v1841 = vpop.f32.mrf.mxu0
        %v1842 = vadd.f32 %v1686, %v1841
        %v1843 = vpop.f32.mrf.mxu0
        %1844 = vdwg.mxu0
        %1845 = vxpose.xlu0.b32.start [1/16] %v1783, 128
        %1846 = vxpose.xlu0.b32.cont [2/16] %v1786, 128
        %1847 = vxpose.xlu0.b32.cont [3/16] %v1791, 128
        %1848 = vxpose.xlu0.b32.cont [4/16] %v1794, 128
        %1849 = vxpose.xlu0.b32.cont [5/16] %v1799, 128
        %1850 = vxpose.xlu0.b32.cont [6/16] %v1802, 128
        %1851 = vxpose.xlu0.b32.cont [7/16] %v1807, 128
        %1852 = vxpose.xlu0.b32.cont [8/16] %v1810, 128
        %1853 = vxpose.xlu0.b32.cont [9/16] %v1815, 128
        %1854 = vxpose.xlu0.b32.cont [10/16] %v1818, 128
        %1855 = vxpose.xlu0.b32.cont [11/16] %v1823, 128
        %1856 = vxpose.xlu0.b32.cont [12/16] %v1826, 128
        %1857 = vxpose.xlu0.b32.cont [13/16] %v1831, 128
        %1858 = vxpose.xlu0.b32.cont [14/16] %v1834, 128
        %1859 = vxpose.xlu0.b32.cont [15/16] %v1839, 128
        %1860 = vxpose.xlu0.b32.end [16/16] %v1842, 128
        %v1861 = vpop.trf.xlu0
        %v1862 = vpop.trf.xlu0
        %v1863 = vpop.trf.xlu0
        %v1864 = vpop.trf.xlu0
        %v1865 = vpop.trf.xlu0
        %v1866 = vpop.trf.xlu0
        %v1867 = vpop.trf.xlu0
        %v1868 = vpop.trf.xlu0
        %v1869 = vpop.trf.xlu0
        %v1870 = vpop.trf.xlu0
        %v1871 = vpop.trf.xlu0
        %v1872 = vpop.trf.xlu0
        %v1873 = vpop.trf.xlu0
        %v1874 = vpop.trf.xlu0
        %v1875 = vpop.trf.xlu0
        %v1876 = vpop.trf.xlu0
        %1877 = vst [vmem:[%s187] sm:$0xff] %v1861
        %s1878 = sand.u32 %s109, 1
        %s1879 = scalar_lea.sflag [#allocation3], %s1878
        %s1880 = sand.u32 %s109, 1
        %s1881 = smul.addr %s1880, 8
        %s1882 = scalar_lea.vmem [#allocation2], %s1881
        // Predicated region
        $region33: #{tpu_custom_call.1} parent=31 // pred_check
          %p1883 = pneg %p119
        $region34: #{tpu_custom_call.1} parent=31 // pred_check_branch
          %1885 = sbr.rel (%p1883) target = $region36
        $region35: #{tpu_custom_call.1} parent=31 // pred_region
          %s1887 = ssub.s32 128, 128
          %1888 = vsyncadd %s1879, %s1887
          %s1889 = smul.addr %s21, 2
          %s1890 = sadd.s32 %s22, %s1889
          %s1891 = smul.addr %s1890, 128
          %s1892 = scalar_lea.hbm %s3, %s1891
          %s1894 = sshll.u32 %s1882, 4
          %s1895 = int_to_ptr.vmem [resolvable:$true] %s1894
          %1897 = dma.vmem_to_hbm [thread:$0]  %s1895, 128, %s1892, %s1879
        $region36: #{tpu_custom_call.1} parent=31 // pred_fallthru
          _
      $region32: #{tpu_custom_call.1} parent=5 // pred_fallthru
        _
      %p1898 = scmp.le.s32.totalorder 2, %s12
      // Predicated region
      $region37: #{tpu_custom_call.1} parent=5 // pred_check
        %p1899 = pneg %p1898
      $region38: #{tpu_custom_call.1} parent=5 // pred_check_branch
        %1901 = sbr.rel (%p1899) target = $region40
      $region39: #{tpu_custom_call.1} parent=5 // pred_region
        %s1902 = ssub.s32 %s12, 2
        // Predicated region
        $region41: #{tpu_custom_call.1} parent=39 // pred_check
          %p1903 = pneg %p125
        $region42: #{tpu_custom_call.1} parent=39 // pred_check_branch
          %1905 = sbr.rel (%p1903) target = $region44
        $region43: #{tpu_custom_call.1} parent=39 // pred_region
          %s1906 = sand.u32 %s110, 1
          %s1907 = scalar_lea.sflag [#allocation3], %s1906
          %s1908 = sand.u32 %s110, 1
          %s1909 = smul.addr %s1908, 8
          %s1910 = scalar_lea.vmem [#allocation2], %s1909
          %1911 = dma.done %s1907, 128
        $region44: #{tpu_custom_call.1} parent=39 // pred_fallthru
          _
      $region40: #{tpu_custom_call.1} parent=5 // pred_fallthru
        _
    $region6: #{tpu_custom_call.1} parent=1 // loop_footer
      %s16 = sadd.s32 1, %s12
    $region7: #{tpu_custom_call.1} parent=1 // loop_footer_branch
      %11 = sbr.rel target = $region3
    $region8: #{tpu_custom_call.1} parent=1 // loop_exit
      _
    %1912 = vsyncpa [#allocation3], 1
    %s1913 = scalar_lea.sflag [#allocation3], 1
    %1914 = vsyncpa %s1913, 1

</llo_original>
